<compile_context>
chip_gen: v6e
topology: v6e:2x2x1
jax: 0.10.0
libtpu: 0.0.40
codegen_flags: <defaults>
</compile_context>

<pallas_src>
import functools

import jax
import jax.numpy as jnp
from jax.experimental import pallas as pl
from jax.experimental.pallas import tpu as pltpu

_BN_EPS = 1e-5
_COS_EPS = 1e-8
_LANE = 128


def _round_up(n, m):
    return (n + m - 1) // m * m


def _pad_last(a, target):
    pad = target - a.shape[-1]
    if pad == 0:
        return a
    return jnp.pad(a, [(0, 0)] * (a.ndim - 1) + [(0, pad)])


def _pad2(a, rows, cols):
    pr, pc = rows - a.shape[0], cols - a.shape[1]
    if pr == 0 and pc == 0:
        return a
    return jnp.pad(a, ((0, pr), (0, pc)))


# ---------------------------------------------------------------------------
# Kernel 1: per-view projection + prediction MLP.
# Grid = (2,) over the two views ("parallel" -> one view per TC on v7x).
# Weights are fetched once (constant index_map) and stay VMEM-resident.
# Matmuls: bf16 operands (by default), f32 accumulation; everything else f32.
# ---------------------------------------------------------------------------
def _mlp_view_kernel(x_ref, pw0_ref, pg0_ref, pb0_ref, pw1_ref,
                     qw0_ref, qg_ref, qb_ref, qw1_ref, qbias_ref,
                     z_ref, p_ref, *, matmul_dtype):
    x = x_ref[...]                                  # (B, Cin_p) f32

    def bn(h, gamma=None, beta=None):
        # PyTorch training-mode BatchNorm1d (biased var), stats per view in f32.
        mu = jnp.mean(h, axis=0, keepdims=True)
        var = jnp.mean(jnp.square(h - mu), axis=0, keepdims=True)
        hn = (h - mu) * jax.lax.rsqrt(var + _BN_EPS)
        if gamma is not None:
            hn = hn * gamma + beta
        return hn

    def mm(a, w_ref):
        # MXU matmul: narrow operands, f32 accumulation.
        return jnp.dot(a.astype(matmul_dtype), w_ref[...],
                       preferred_element_type=jnp.float32)

    # projection MLP: Linear -> BN(affine) -> ReLU -> Linear -> BN(affine=False)
    h = jnp.maximum(bn(mm(x, pw0_ref), pg0_ref[...], pb0_ref[...]), 0.0)
    z = bn(mm(h, pw1_ref))
    # prediction MLP: Linear -> BN(affine) -> ReLU -> Linear(+bias)
    u = jnp.maximum(bn(mm(z, qw0_ref), qg_ref[...], qb_ref[...]), 0.0)
    p = mm(u, qw1_ref) + qbias_ref[...]

    z_ref[...] = z
    p_ref[...] = p


# ---------------------------------------------------------------------------
# Kernel 2: loss epilogue (all scalar reductions), f32 throughout.
# ---------------------------------------------------------------------------
def _loss_kernel(x_ref, z_ref, p_ref, pre_sim_ref, p_norm_ref, q_norm_ref, loss_ref):
    def row_sumsq(a):
        return jnp.sum(a * a, axis=-1, keepdims=True)

    def cos_mean(a, b):
        # cosine_similarity with eps-guard, via rsqrt (EUP) instead of sqrt+div.
        dot = jnp.sum(a * b, axis=-1, keepdims=True)
        inv_a = jax.lax.rsqrt(jnp.maximum(row_sumsq(a), _COS_EPS * _COS_EPS))
        inv_b = jax.lax.rsqrt(jnp.maximum(row_sumsq(b), _COS_EPS * _COS_EPS))
        return jnp.mean(dot * inv_a * inv_b)

    x1, x2 = x_ref[0], x_ref[1]
    z1, z2 = z_ref[0], z_ref[1]
    p1, p2 = p_ref[0], p_ref[1]

    pre_sim_ref[0, 0] = cos_mean(x1, x2)
    p_norm_ref[0, 0] = jnp.mean(jnp.sqrt(row_sumsq(p1)))
    q_norm_ref[0, 0] = jnp.mean(jnp.sqrt(row_sumsq(z1)))
    # loss = D(p1, q2)/2 + D(p2, q1)/2 with D = -cos_sim(...).mean()
    loss_ref[0, 0] = -0.5 * (cos_mean(p1, z2) + cos_mean(p2, z1))


# ---------------------------------------------------------------------------
# Wrapper reproducing TestHead.forward(x1, x2)
# ---------------------------------------------------------------------------
def test_head_forward(params, x1, x2, *, matmul_dtype=jnp.bfloat16):
    B, Cin = x1.shape
    Cout = params["proj_w1"].shape[1]
    Ch = params["pred_w0"].shape[1]
    Cin_p = _round_up(Cin, _LANE)
    Cout_p = _round_up(Cout, _LANE)
    Ch_p = _round_up(Ch, _LANE)

    # Views stacked on a leading axis; lane axis padded to 128 so every matmul
    # tile and store is full lane width.  (In production, pre-stack/pre-pad
    # once outside the step to avoid this per-call copy.)
    x = jnp.stack([_pad_last(x1.astype(jnp.float32), Cin_p),
                   _pad_last(x2.astype(jnp.float32), Cin_p)], axis=0)

    md = matmul_dtype
    pw0 = _pad2(params["proj_w0"], Cin_p, Cout_p).astype(md)
    pw1 = _pad2(params["proj_w1"], Cout_p, Cout_p).astype(md)
    qw0 = _pad2(params["pred_w0"], Cout_p, Ch_p).astype(md)
    qw1 = _pad2(params["pred_w1"], Ch_p, Cout_p).astype(md)
    pg0 = _pad_last(params["proj_bn0_gamma"], Cout_p)
    pb0 = _pad_last(params["proj_bn0_beta"], Cout_p)
    qg = _pad_last(params["pred_bn_gamma"], Ch_p)
    qb = _pad_last(params["pred_bn_beta"], Ch_p)
    qb1 = _pad_last(params["pred_b1"], Cout_p)

    # --- VMEM budget & cost estimate (sized from real footprint) ---
    w_item = jnp.dtype(md).itemsize
    weight_bytes = (pw0.size + pw1.size + qw0.size + qw1.size) * w_item \
                   + (pg0.size + pb0.size + qg.size + qb.size + qb1.size) * 4
    act_bytes = B * (2 * Cin_p + 6 * Cout_p + 3 * Ch_p) * 4          # f32 temps
    io_bytes = 2 * B * Cin_p * 4 + 2 * 2 * B * Cout_p * 4            # double-buffered blocks
    mlp_vmem = int(min(max(weight_bytes + act_bytes + io_bytes, 32 * 2**20), 96 * 2**20))

    flops = 2 * 2 * B * (Cin_p * Cout_p + Cout_p * Cout_p + Cout_p * Ch_p + Ch_p * Cout_p)
    bytes_accessed = int(x.size * 4 + weight_bytes + 2 * 2 * B * Cout_p * 4)

    const2 = lambda v: (0, 0)
    view3 = lambda n: pl.BlockSpec((None, B, n), lambda v: (v, 0, 0))

    z, p = pl.pallas_call(
        functools.partial(_mlp_view_kernel, matmul_dtype=md),
        grid=(2,),
        out_shape=(jax.ShapeDtypeStruct((2, B, Cout_p), jnp.float32),
                   jax.ShapeDtypeStruct((2, B, Cout_p), jnp.float32)),
        in_specs=[
            view3(Cin_p),                                  # x, one view per step
            pl.BlockSpec((Cin_p, Cout_p), const2),         # proj_w0 (resident)
            pl.BlockSpec((1, Cout_p), const2),             # proj bn gamma
            pl.BlockSpec((1, Cout_p), const2),             # proj bn beta
            pl.BlockSpec((Cout_p, Cout_p), const2),        # proj_w1
            pl.BlockSpec((Cout_p, Ch_p), const2),          # pred_w0
            pl.BlockSpec((1, Ch_p), const2),               # pred bn gamma
            pl.BlockSpec((1, Ch_p), const2),               # pred bn beta
            pl.BlockSpec((Ch_p, Cout_p), const2),          # pred_w1
            pl.BlockSpec((1, Cout_p), const2),             # pred bias
        ],
        out_specs=(view3(Cout_p), view3(Cout_p)),
        compiler_params=pltpu.CompilerParams(
            dimension_semantics=("parallel",),
            vmem_limit_bytes=mlp_vmem),
        cost_estimate=pl.CostEstimate(
            flops=flops,
            transcendentals=2 * (2 * Cout_p + Ch_p),
            bytes_accessed=bytes_accessed),
    )(x, pw0, pg0, pb0, pw1, qw0, qg, qb, qw1, qb1)

    vmem = pl.BlockSpec(memory_space=pltpu.MemorySpace.VMEM)
    smem = pl.BlockSpec(memory_space=pltpu.MemorySpace.SMEM)
    scalar = jax.ShapeDtypeStruct((1, 1), jnp.float32)
    epi_vmem = int(min(max(2 * (x.size + z.size + p.size) * 4, 32 * 2**20), 96 * 2**20))

    pre_sim, p_norm, q_norm, loss = pl.pallas_call(
        _loss_kernel,
        out_shape=(scalar, scalar, scalar, scalar),
        in_specs=[vmem, vmem, vmem],
        out_specs=(smem, smem, smem, smem),
        compiler_params=pltpu.CompilerParams(vmem_limit_bytes=epi_vmem),
    )(x, z, p)

    loss_s = loss[0, 0]
    return {
        "pre-sim": pre_sim[0, 0],
        "p_norm": p_norm[0, 0],
        "q_norm": q_norm[0, 0],
        "sim": loss_s,
        "loss": loss_s,
    }


# ---------------------------------------------------------------------------
# Deterministic parameter init (shapes from TestHead.__init__, proj_layers=2).
# Weights stored as (in_features, out_features) so y = x @ W.
# ---------------------------------------------------------------------------
def init_params(key, in_channels, hidden_channels, out_channels):
    ks = jax.random.split(key, 5)

    def lin(k, fan_in, fan_out):
        bound = fan_in ** -0.5
        return jax.random.uniform(k, (fan_in, fan_out), jnp.float32, -bound, bound)

    return dict(
        proj_w0=lin(ks[0], in_channels, out_channels),
        proj_bn0_gamma=jnp.ones((1, out_channels), jnp.float32),
        proj_bn0_beta=jnp.zeros((1, out_channels), jnp.float32),
        proj_w1=lin(ks[1], out_channels, out_channels),
        pred_w0=lin(ks[2], out_channels, hidden_channels),
        pred_bn_gamma=jnp.ones((1, hidden_channels), jnp.float32),
        pred_bn_beta=jnp.zeros((1, hidden_channels), jnp.float32),
        pred_w1=lin(ks[3], hidden_channels, out_channels),
        pred_b1=jax.random.uniform(ks[4], (1, out_channels), jnp.float32,
                                   -(hidden_channels ** -0.5), hidden_channels ** -0.5),
    )


# ---------------------------------------------------------------------------
# Pure-JAX reference with the SAME matmul precision policy (operands cast to
# matmul_dtype, f32 accumulation, all stats/reductions f32) for validation.
# ---------------------------------------------------------------------------
def _reference_forward(params, x1, x2, matmul_dtype=jnp.float32):
    def bn(h, gamma=None, beta=None):
        mu = jnp.mean(h, axis=0, keepdims=True)
        var = jnp.mean((h - mu) ** 2, axis=0, keepdims=True)
        hn = (h - mu) / jnp.sqrt(var + _BN_EPS)
        if gamma is not None:
            hn = hn * gamma + beta
        return hn

    def mm(a, w):
        return jnp.dot(a.astype(matmul_dtype), w.astype(matmul_dtype),
                       preferred_element_type=jnp.float32)

    def mlp(x):
        h = jnp.maximum(bn(mm(x, params["proj_w0"]),
                           params["proj_bn0_gamma"], params["proj_bn0_beta"]), 0.0)
        z = bn(mm(h, params["proj_w1"]))
        u = jnp.maximum(bn(mm(z, params["pred_w0"]),
                           params["pred_bn_gamma"], params["pred_bn_beta"]), 0.0)
        p = mm(u, params["pred_w1"]) + params["pred_b1"]
        return z, p

    def cos_mean(a, b):
        dot = jnp.sum(a * b, axis=-1)
        na = jnp.maximum(jnp.linalg.norm(a, axis=-1), _COS_EPS)
        nb = jnp.maximum(jnp.linalg.norm(b, axis=-1), _COS_EPS)
        return jnp.mean(dot / (na * nb))

    z1, p1 = mlp(x1.astype(jnp.float32))
    z2, p2 = mlp(x2.astype(jnp.float32))
    return {
        "pre-sim": cos_mean(x1, x2),
        "p_norm": jnp.mean(jnp.linalg.norm(p1, axis=1)),
        "q_norm": jnp.mean(jnp.linalg.norm(z1, axis=1)),
        "loss": -0.5 * (cos_mean(p1, z2) + cos_mean(p2, z1)),
    }


if __name__ == "__main__":
    B, Cin, Ch, Cout = 8, 32, 16, 32   # small shapes consistent with (in, hidden, out)
    key = jax.random.PRNGKey(0)
    kx1, kx2, kp = jax.random.split(key, 3)
    x1 = jax.random.normal(kx1, (B, Cin), jnp.float32)
    x2 = jax.random.normal(kx2, (B, Cin), jnp.float32)
    params = init_params(kp, Cin, Ch, Cout)

    outputs = None
    # Validate both the default bf16-MXU path and the f32 path against a
    # precision-policy-matched pure-JAX reference.
    for md, tol in ((jnp.bfloat16, 2e-3), (jnp.float32, 5e-4)):
        fwd = jax.jit(functools.partial(test_head_forward, matmul_dtype=md))
        outputs = jax.block_until_ready(fwd(params, x1, x2))
        ref = _reference_forward(params, x1, x2, matmul_dtype=md)
        for k in ("pre-sim", "p_norm", "q_norm", "loss"):
            o, r = float(outputs[k]), float(ref[k])
            assert abs(o - r) <= tol * (1.0 + abs(r)), (str(md), k, o, r)
        assert float(outputs["sim"]) == float(outputs["loss"])

    print("KERNEL_OK")
</pallas_src>

<mosaic_0001>
module attributes {stable_mosaic.version = 11 : i64} {
  func.func @_mlp_view_kernel(%arg0: i32, %arg1: memref<1x8x128xf32, #tpu.memory_space<vmem>>, %arg2: memref<128x128xbf16, #tpu.memory_space<vmem>>, %arg3: memref<1x128xf32, #tpu.memory_space<vmem>>, %arg4: memref<1x128xf32, #tpu.memory_space<vmem>>, %arg5: memref<128x128xbf16, #tpu.memory_space<vmem>>, %arg6: memref<128x128xbf16, #tpu.memory_space<vmem>>, %arg7: memref<1x128xf32, #tpu.memory_space<vmem>>, %arg8: memref<1x128xf32, #tpu.memory_space<vmem>>, %arg9: memref<128x128xbf16, #tpu.memory_space<vmem>>, %arg10: memref<1x128xf32, #tpu.memory_space<vmem>>, %arg11: memref<1x8x128xf32, #tpu.memory_space<vmem>>, %arg12: memref<1x8x128xf32, #tpu.memory_space<vmem>>) attributes {dimension_semantics = [#tpu.dimension_semantics<parallel>], iteration_bounds = array<i64: 2>, scalar_prefetch = 0 : i64, scratch_operands = 0 : i64, tpu.core_type = #tpu.core_type<tc>, window_params = [{transform_indices = @transform_0, window_bounds = array<i64: 1, 8, 128>}, {pipeline_mode = #tpu.pipeline_mode<synchronous>, transform_indices = @transform_1, window_bounds = array<i64: 128, 128>}, {pipeline_mode = #tpu.pipeline_mode<synchronous>, transform_indices = @transform_2, window_bounds = array<i64: 1, 128>}, {pipeline_mode = #tpu.pipeline_mode<synchronous>, transform_indices = @transform_3, window_bounds = array<i64: 1, 128>}, {pipeline_mode = #tpu.pipeline_mode<synchronous>, transform_indices = @transform_4, window_bounds = array<i64: 128, 128>}, {pipeline_mode = #tpu.pipeline_mode<synchronous>, transform_indices = @transform_5, window_bounds = array<i64: 128, 128>}, {pipeline_mode = #tpu.pipeline_mode<synchronous>, transform_indices = @transform_6, window_bounds = array<i64: 1, 128>}, {pipeline_mode = #tpu.pipeline_mode<synchronous>, transform_indices = @transform_7, window_bounds = array<i64: 1, 128>}, {pipeline_mode = #tpu.pipeline_mode<synchronous>, transform_indices = @transform_8, window_bounds = array<i64: 128, 128>}, {pipeline_mode = #tpu.pipeline_mode<synchronous>, transform_indices = @transform_9, window_bounds = array<i64: 1, 128>}, {transform_indices = @transform_10, window_bounds = array<i64: 1, 8, 128>}, {transform_indices = @transform_11, window_bounds = array<i64: 1, 8, 128>}]} {
    %c0 = arith.constant 0 : index
    %c0_0 = arith.constant 0 : index
    %c0_1 = arith.constant 0 : index
    %0 = vector.load %arg1[%c0, %c0_0, %c0_1] : memref<1x8x128xf32, #tpu.memory_space<vmem>>, vector<1x8x128xf32>
    %1 = vector.shape_cast %0 : vector<1x8x128xf32> to vector<8x128xf32>
    %2 = arith.truncf %1 : vector<8x128xf32> to vector<8x128xbf16>
    %c0_2 = arith.constant 0 : index
    %c0_3 = arith.constant 0 : index
    %3 = vector.load %arg2[%c0_2, %c0_3] : memref<128x128xbf16, #tpu.memory_space<vmem>>, vector<128x128xbf16>
    %cst = arith.constant dense<0.000000e+00> : vector<8x128xf32>
    %4 = tpu.matmul %2, %3, %cst {dimension_numbers = #tpu.dot_dimension_numbers<[1], [0], [0], [1], [0, 0, 1, 1], [], []>} : vector<8x128xbf16>, vector<128x128xbf16>, vector<8x128xf32> -> vector<8x128xf32>
    %c0_4 = arith.constant 0 : index
    %c0_5 = arith.constant 0 : index
    %5 = vector.load %arg3[%c0_4, %c0_5] : memref<1x128xf32, #tpu.memory_space<vmem>>, vector<1x128xf32>
    %c0_6 = arith.constant 0 : index
    %c0_7 = arith.constant 0 : index
    %6 = vector.load %arg4[%c0_6, %c0_7] : memref<1x128xf32, #tpu.memory_space<vmem>>, vector<1x128xf32>
    %cst_8 = arith.constant dense<0.000000e+00> : vector<128xf32>
    %7 = vector.multi_reduction <add>, %4, %cst_8 [0] : vector<8x128xf32> to vector<128xf32>
    %8 = vector.shape_cast %7 : vector<128xf32> to vector<1x128xf32>
    %cst_9 = arith.constant 8.000000e+00 : f32
    %9 = vector.broadcast %cst_9 : f32 to vector<1x128xf32>
    %10 = arith.divf %8, %9 : vector<1x128xf32>
    %11 = vector.broadcast %10 : vector<1x128xf32> to vector<8x128xf32>
    %12 = arith.subf %4, %11 : vector<8x128xf32>
    %13 = arith.mulf %12, %12 : vector<8x128xf32>
    %cst_10 = arith.constant dense<0.000000e+00> : vector<128xf32>
    %14 = vector.multi_reduction <add>, %13, %cst_10 [0] : vector<8x128xf32> to vector<128xf32>
    %15 = vector.shape_cast %14 : vector<128xf32> to vector<1x128xf32>
    %cst_11 = arith.constant 8.000000e+00 : f32
    %16 = vector.broadcast %cst_11 : f32 to vector<1x128xf32>
    %17 = arith.divf %15, %16 : vector<1x128xf32>
    %18 = vector.broadcast %10 : vector<1x128xf32> to vector<8x128xf32>
    %19 = arith.subf %4, %18 : vector<8x128xf32>
    %cst_12 = arith.constant 9.99999974E-6 : f32
    %20 = vector.broadcast %cst_12 : f32 to vector<1x128xf32>
    %21 = arith.addf %17, %20 : vector<1x128xf32>
    %22 = math.rsqrt %21 : vector<1x128xf32>
    %23 = vector.broadcast %22 : vector<1x128xf32> to vector<8x128xf32>
    %24 = arith.mulf %19, %23 : vector<8x128xf32>
    %25 = vector.broadcast %5 : vector<1x128xf32> to vector<8x128xf32>
    %26 = arith.mulf %24, %25 : vector<8x128xf32>
    %27 = vector.broadcast %6 : vector<1x128xf32> to vector<8x128xf32>
    %28 = arith.addf %26, %27 : vector<8x128xf32>
    %cst_13 = arith.constant 0.000000e+00 : f32
    %29 = vector.broadcast %cst_13 : f32 to vector<8x128xf32>
    %30 = arith.maximumf %28, %29 : vector<8x128xf32>
    %31 = arith.truncf %30 : vector<8x128xf32> to vector<8x128xbf16>
    %c0_14 = arith.constant 0 : index
    %c0_15 = arith.constant 0 : index
    %32 = vector.load %arg5[%c0_14, %c0_15] : memref<128x128xbf16, #tpu.memory_space<vmem>>, vector<128x128xbf16>
    %cst_16 = arith.constant dense<0.000000e+00> : vector<8x128xf32>
    %33 = tpu.matmul %31, %32, %cst_16 {dimension_numbers = #tpu.dot_dimension_numbers<[1], [0], [0], [1], [0, 0, 1, 1], [], []>} : vector<8x128xbf16>, vector<128x128xbf16>, vector<8x128xf32> -> vector<8x128xf32>
    %cst_17 = arith.constant dense<0.000000e+00> : vector<128xf32>
    %34 = vector.multi_reduction <add>, %33, %cst_17 [0] : vector<8x128xf32> to vector<128xf32>
    %35 = vector.shape_cast %34 : vector<128xf32> to vector<1x128xf32>
    %cst_18 = arith.constant 8.000000e+00 : f32
    %36 = vector.broadcast %cst_18 : f32 to vector<1x128xf32>
    %37 = arith.divf %35, %36 : vector<1x128xf32>
    %38 = vector.broadcast %37 : vector<1x128xf32> to vector<8x128xf32>
    %39 = arith.subf %33, %38 : vector<8x128xf32>
    %40 = arith.mulf %39, %39 : vector<8x128xf32>
    %cst_19 = arith.constant dense<0.000000e+00> : vector<128xf32>
    %41 = vector.multi_reduction <add>, %40, %cst_19 [0] : vector<8x128xf32> to vector<128xf32>
    %42 = vector.shape_cast %41 : vector<128xf32> to vector<1x128xf32>
    %cst_20 = arith.constant 8.000000e+00 : f32
    %43 = vector.broadcast %cst_20 : f32 to vector<1x128xf32>
    %44 = arith.divf %42, %43 : vector<1x128xf32>
    %45 = vector.broadcast %37 : vector<1x128xf32> to vector<8x128xf32>
    %46 = arith.subf %33, %45 : vector<8x128xf32>
    %cst_21 = arith.constant 9.99999974E-6 : f32
    %47 = vector.broadcast %cst_21 : f32 to vector<1x128xf32>
    %48 = arith.addf %44, %47 : vector<1x128xf32>
    %49 = math.rsqrt %48 : vector<1x128xf32>
    %50 = vector.broadcast %49 : vector<1x128xf32> to vector<8x128xf32>
    %51 = arith.mulf %46, %50 : vector<8x128xf32>
    %52 = arith.truncf %51 : vector<8x128xf32> to vector<8x128xbf16>
    %c0_22 = arith.constant 0 : index
    %c0_23 = arith.constant 0 : index
    %53 = vector.load %arg6[%c0_22, %c0_23] : memref<128x128xbf16, #tpu.memory_space<vmem>>, vector<128x128xbf16>
    %cst_24 = arith.constant dense<0.000000e+00> : vector<8x128xf32>
    %54 = tpu.matmul %52, %53, %cst_24 {dimension_numbers = #tpu.dot_dimension_numbers<[1], [0], [0], [1], [0, 0, 1, 1], [], []>} : vector<8x128xbf16>, vector<128x128xbf16>, vector<8x128xf32> -> vector<8x128xf32>
    %c0_25 = arith.constant 0 : index
    %c0_26 = arith.constant 0 : index
    %55 = vector.load %arg7[%c0_25, %c0_26] : memref<1x128xf32, #tpu.memory_space<vmem>>, vector<1x128xf32>
    %c0_27 = arith.constant 0 : index
    %c0_28 = arith.constant 0 : index
    %56 = vector.load %arg8[%c0_27, %c0_28] : memref<1x128xf32, #tpu.memory_space<vmem>>, vector<1x128xf32>
    %cst_29 = arith.constant dense<0.000000e+00> : vector<128xf32>
    %57 = vector.multi_reduction <add>, %54, %cst_29 [0] : vector<8x128xf32> to vector<128xf32>
    %58 = vector.shape_cast %57 : vector<128xf32> to vector<1x128xf32>
    %cst_30 = arith.constant 8.000000e+00 : f32
    %59 = vector.broadcast %cst_30 : f32 to vector<1x128xf32>
    %60 = arith.divf %58, %59 : vector<1x128xf32>
    %61 = vector.broadcast %60 : vector<1x128xf32> to vector<8x128xf32>
    %62 = arith.subf %54, %61 : vector<8x128xf32>
    %63 = arith.mulf %62, %62 : vector<8x128xf32>
    %cst_31 = arith.constant dense<0.000000e+00> : vector<128xf32>
    %64 = vector.multi_reduction <add>, %63, %cst_31 [0] : vector<8x128xf32> to vector<128xf32>
    %65 = vector.shape_cast %64 : vector<128xf32> to vector<1x128xf32>
    %cst_32 = arith.constant 8.000000e+00 : f32
    %66 = vector.broadcast %cst_32 : f32 to vector<1x128xf32>
    %67 = arith.divf %65, %66 : vector<1x128xf32>
    %68 = vector.broadcast %60 : vector<1x128xf32> to vector<8x128xf32>
    %69 = arith.subf %54, %68 : vector<8x128xf32>
    %cst_33 = arith.constant 9.99999974E-6 : f32
    %70 = vector.broadcast %cst_33 : f32 to vector<1x128xf32>
    %71 = arith.addf %67, %70 : vector<1x128xf32>
    %72 = math.rsqrt %71 : vector<1x128xf32>
    %73 = vector.broadcast %72 : vector<1x128xf32> to vector<8x128xf32>
    %74 = arith.mulf %69, %73 : vector<8x128xf32>
    %75 = vector.broadcast %55 : vector<1x128xf32> to vector<8x128xf32>
    %76 = arith.mulf %74, %75 : vector<8x128xf32>
    %77 = vector.broadcast %56 : vector<1x128xf32> to vector<8x128xf32>
    %78 = arith.addf %76, %77 : vector<8x128xf32>
    %cst_34 = arith.constant 0.000000e+00 : f32
    %79 = vector.broadcast %cst_34 : f32 to vector<8x128xf32>
    %80 = arith.maximumf %78, %79 : vector<8x128xf32>
    %81 = arith.truncf %80 : vector<8x128xf32> to vector<8x128xbf16>
    %c0_35 = arith.constant 0 : index
    %c0_36 = arith.constant 0 : index
    %82 = vector.load %arg9[%c0_35, %c0_36] : memref<128x128xbf16, #tpu.memory_space<vmem>>, vector<128x128xbf16>
    %cst_37 = arith.constant dense<0.000000e+00> : vector<8x128xf32>
    %83 = tpu.matmul %81, %82, %cst_37 {dimension_numbers = #tpu.dot_dimension_numbers<[1], [0], [0], [1], [0, 0, 1, 1], [], []>} : vector<8x128xbf16>, vector<128x128xbf16>, vector<8x128xf32> -> vector<8x128xf32>
    %c0_38 = arith.constant 0 : index
    %c0_39 = arith.constant 0 : index
    %84 = vector.load %arg10[%c0_38, %c0_39] : memref<1x128xf32, #tpu.memory_space<vmem>>, vector<1x128xf32>
    %85 = vector.broadcast %84 : vector<1x128xf32> to vector<8x128xf32>
    %86 = arith.addf %83, %85 : vector<8x128xf32>
    %c0_40 = arith.constant 0 : index
    %c0_41 = arith.constant 0 : index
    %c0_42 = arith.constant 0 : index
    %87 = vector.load %arg11[%c0_40, %c0_41, %c0_42] : memref<1x8x128xf32, #tpu.memory_space<vmem>>, vector<1x8x128xf32>
    %88 = vector.shape_cast %87 : vector<1x8x128xf32> to vector<8x128xf32>
    %89 = vector.shape_cast %51 : vector<8x128xf32> to vector<1x8x128xf32>
    tpu.vector_store %arg11[%c0_40, %c0_41, %c0_42], %89 {strides = array<i32>} : memref<1x8x128xf32, #tpu.memory_space<vmem>>, vector<1x8x128xf32>,
    %c0_43 = arith.constant 0 : index
    %c0_44 = arith.constant 0 : index
    %c0_45 = arith.constant 0 : index
    %90 = vector.load %arg12[%c0_43, %c0_44, %c0_45] : memref<1x8x128xf32, #tpu.memory_space<vmem>>, vector<1x8x128xf32>
    %91 = vector.shape_cast %90 : vector<1x8x128xf32> to vector<8x128xf32>
    %92 = vector.shape_cast %86 : vector<8x128xf32> to vector<1x8x128xf32>
    tpu.vector_store %arg12[%c0_43, %c0_44, %c0_45], %92 {strides = array<i32>} : memref<1x8x128xf32, #tpu.memory_space<vmem>>, vector<1x8x128xf32>,
    return
  }
  func.func @transform_0(%arg0: i32) -> (i32, i32, i32) {
    %c0_i32 = arith.constant 0 : i32
    %c0_i32_0 = arith.constant 0 : i32
    %c0_i32_1 = arith.constant 0 : i32
    return %arg0, %c0_i32, %c0_i32_0 : i32, i32, i32
  }
  func.func @transform_1(%arg0: i32) -> (i32, i32) {
    %c0_i32 = arith.constant 0 : i32
    %c0_i32_0 = arith.constant 0 : i32
    %c0_i32_1 = arith.constant 0 : i32
    return %c0_i32, %c0_i32_0 : i32, i32
  }
  func.func @transform_2(%arg0: i32) -> (i32, i32) {
    %c0_i32 = arith.constant 0 : i32
    %c0_i32_0 = arith.constant 0 : i32
    %c0_i32_1 = arith.constant 0 : i32
    return %c0_i32, %c0_i32_0 : i32, i32
  }
  func.func @transform_3(%arg0: i32) -> (i32, i32) {
    %c0_i32 = arith.constant 0 : i32
    %c0_i32_0 = arith.constant 0 : i32
    %c0_i32_1 = arith.constant 0 : i32
    return %c0_i32, %c0_i32_0 : i32, i32
  }
  func.func @transform_4(%arg0: i32) -> (i32, i32) {
    %c0_i32 = arith.constant 0 : i32
    %c0_i32_0 = arith.constant 0 : i32
    %c0_i32_1 = arith.constant 0 : i32
    return %c0_i32, %c0_i32_0 : i32, i32
  }
  func.func @transform_5(%arg0: i32) -> (i32, i32) {
    %c0_i32 = arith.constant 0 : i32
    %c0_i32_0 = arith.constant 0 : i32
    %c0_i32_1 = arith.constant 0 : i32
    return %c0_i32, %c0_i32_0 : i32, i32
  }
  func.func @transform_6(%arg0: i32) -> (i32, i32) {
    %c0_i32 = arith.constant 0 : i32
    %c0_i32_0 = arith.constant 0 : i32
    %c0_i32_1 = arith.constant 0 : i32
    return %c0_i32, %c0_i32_0 : i32, i32
  }
  func.func @transform_7(%arg0: i32) -> (i32, i32) {
    %c0_i32 = arith.constant 0 : i32
    %c0_i32_0 = arith.constant 0 : i32
    %c0_i32_1 = arith.constant 0 : i32
    return %c0_i32, %c0_i32_0 : i32, i32
  }
  func.func @transform_8(%arg0: i32) -> (i32, i32) {
    %c0_i32 = arith.constant 0 : i32
    %c0_i32_0 = arith.constant 0 : i32
    %c0_i32_1 = arith.constant 0 : i32
    return %c0_i32, %c0_i32_0 : i32, i32
  }
  func.func @transform_9(%arg0: i32) -> (i32, i32) {
    %c0_i32 = arith.constant 0 : i32
    %c0_i32_0 = arith.constant 0 : i32
    %c0_i32_1 = arith.constant 0 : i32
    return %c0_i32, %c0_i32_0 : i32, i32
  }
  func.func @transform_10(%arg0: i32) -> (i32, i32, i32) {
    %c0_i32 = arith.constant 0 : i32
    %c0_i32_0 = arith.constant 0 : i32
    %c0_i32_1 = arith.constant 0 : i32
    return %arg0, %c0_i32, %c0_i32_0 : i32, i32, i32
  }
  func.func @transform_11(%arg0: i32) -> (i32, i32, i32) {
    %c0_i32 = arith.constant 0 : i32
    %c0_i32_0 = arith.constant 0 : i32
    %c0_i32_1 = arith.constant 0 : i32
    return %arg0, %c0_i32, %c0_i32_0 : i32, i32, i32
  }
}

module attributes {stable_mosaic.version = 11 : i64} {
  func.func @_loss_kernel(%arg0: memref<2x8x128xf32, #tpu.memory_space<vmem>>, %arg1: memref<2x8x128xf32, #tpu.memory_space<vmem>>, %arg2: memref<2x8x128xf32, #tpu.memory_space<vmem>>, %arg3: memref<1x1xf32, #tpu.memory_space<smem>>, %arg4: memref<1x1xf32, #tpu.memory_space<smem>>, %arg5: memref<1x1xf32, #tpu.memory_space<smem>>, %arg6: memref<1x1xf32, #tpu.memory_space<smem>>) attributes {dimension_semantics = [], scalar_prefetch = 0 : i64, scratch_operands = 0 : i64, tpu.core_type = #tpu.core_type<tc>} {
    %c0 = arith.constant 0 : index
    %c0_0 = arith.constant 0 : index
    %c0_1 = arith.constant 0 : index
    %0 = vector.load %arg0[%c0, %c0_0, %c0_1] : memref<2x8x128xf32, #tpu.memory_space<vmem>>, vector<1x8x128xf32>
    %1 = vector.shape_cast %0 : vector<1x8x128xf32> to vector<8x128xf32>
    %c1 = arith.constant 1 : index
    %c0_2 = arith.constant 0 : index
    %c0_3 = arith.constant 0 : index
    %2 = vector.load %arg0[%c1, %c0_2, %c0_3] : memref<2x8x128xf32, #tpu.memory_space<vmem>>, vector<1x8x128xf32>
    %3 = vector.shape_cast %2 : vector<1x8x128xf32> to vector<8x128xf32>
    %c0_4 = arith.constant 0 : index
    %c0_5 = arith.constant 0 : index
    %c0_6 = arith.constant 0 : index
    %4 = vector.load %arg1[%c0_4, %c0_5, %c0_6] : memref<2x8x128xf32, #tpu.memory_space<vmem>>, vector<1x8x128xf32>
    %5 = vector.shape_cast %4 : vector<1x8x128xf32> to vector<8x128xf32>
    %c1_7 = arith.constant 1 : index
    %c0_8 = arith.constant 0 : index
    %c0_9 = arith.constant 0 : index
    %6 = vector.load %arg1[%c1_7, %c0_8, %c0_9] : memref<2x8x128xf32, #tpu.memory_space<vmem>>, vector<1x8x128xf32>
    %7 = vector.shape_cast %6 : vector<1x8x128xf32> to vector<8x128xf32>
    %c0_10 = arith.constant 0 : index
    %c0_11 = arith.constant 0 : index
    %c0_12 = arith.constant 0 : index
    %8 = vector.load %arg2[%c0_10, %c0_11, %c0_12] : memref<2x8x128xf32, #tpu.memory_space<vmem>>, vector<1x8x128xf32>
    %9 = vector.shape_cast %8 : vector<1x8x128xf32> to vector<8x128xf32>
    %c1_13 = arith.constant 1 : index
    %c0_14 = arith.constant 0 : index
    %c0_15 = arith.constant 0 : index
    %10 = vector.load %arg2[%c1_13, %c0_14, %c0_15] : memref<2x8x128xf32, #tpu.memory_space<vmem>>, vector<1x8x128xf32>
    %11 = vector.shape_cast %10 : vector<1x8x128xf32> to vector<8x128xf32>
    %12 = arith.mulf %1, %3 : vector<8x128xf32>
    %cst = arith.constant dense<0.000000e+00> : vector<8xf32>
    %13 = vector.multi_reduction <add>, %12, %cst [1] : vector<8x128xf32> to vector<8xf32>
    %14 = vector.shape_cast %13 : vector<8xf32> to vector<8x1xf32>
    %15 = arith.mulf %1, %1 : vector<8x128xf32>
    %cst_16 = arith.constant dense<0.000000e+00> : vector<8xf32>
    %16 = vector.multi_reduction <add>, %15, %cst_16 [1] : vector<8x128xf32> to vector<8xf32>
    %17 = vector.shape_cast %16 : vector<8xf32> to vector<8x1xf32>
    %cst_17 = arith.constant 1.000000e-16 : f32
    %18 = vector.broadcast %cst_17 : f32 to vector<8x1xf32>
    %19 = arith.maximumf %17, %18 : vector<8x1xf32>
    %20 = math.rsqrt %19 : vector<8x1xf32>
    %21 = arith.mulf %3, %3 : vector<8x128xf32>
    %cst_18 = arith.constant dense<0.000000e+00> : vector<8xf32>
    %22 = vector.multi_reduction <add>, %21, %cst_18 [1] : vector<8x128xf32> to vector<8xf32>
    %23 = vector.shape_cast %22 : vector<8xf32> to vector<8x1xf32>
    %cst_19 = arith.constant 1.000000e-16 : f32
    %24 = vector.broadcast %cst_19 : f32 to vector<8x1xf32>
    %25 = arith.maximumf %23, %24 : vector<8x1xf32>
    %26 = math.rsqrt %25 : vector<8x1xf32>
    %27 = arith.mulf %14, %20 : vector<8x1xf32>
    %28 = arith.mulf %27, %26 : vector<8x1xf32>
    %29 = vector.shape_cast %28 : vector<8x1xf32> to vector<1x8x1xf32>
    %cst_20 = arith.constant dense<0.000000e+00> : vector<1xf32>
    %30 = vector.multi_reduction <add>, %29, %cst_20 [1, 2] : vector<1x8x1xf32> to vector<1xf32>
    %31 = vector.shape_cast %30 : vector<1xf32> to vector<1x1x1xf32>
    %32 = vector.extract %31[0, 0, 0] : f32 from vector<1x1x1xf32>
    %cst_21 = arith.constant 8.000000e+00 : f32
    %33 = arith.divf %32, %cst_21 : f32
    %c0_22 = arith.constant 0 : index
    %c0_23 = arith.constant 0 : index
    %34 = memref.load %arg3[%c0_22, %c0_23] : memref<1x1xf32, #tpu.memory_space<smem>>
    memref.store %33, %arg3[%c0_22, %c0_23] : memref<1x1xf32, #tpu.memory_space<smem>>
    %35 = arith.mulf %9, %9 : vector<8x128xf32>
    %cst_24 = arith.constant dense<0.000000e+00> : vector<8xf32>
    %36 = vector.multi_reduction <add>, %35, %cst_24 [1] : vector<8x128xf32> to vector<8xf32>
    %37 = vector.shape_cast %36 : vector<8xf32> to vector<8x1xf32>
    %38 = math.sqrt %37 : vector<8x1xf32>
    %39 = vector.shape_cast %38 : vector<8x1xf32> to vector<1x8x1xf32>
    %cst_25 = arith.constant dense<0.000000e+00> : vector<1xf32>
    %40 = vector.multi_reduction <add>, %39, %cst_25 [1, 2] : vector<1x8x1xf32> to vector<1xf32>
    %41 = vector.shape_cast %40 : vector<1xf32> to vector<1x1x1xf32>
    %42 = vector.extract %41[0, 0, 0] : f32 from vector<1x1x1xf32>
    %cst_26 = arith.constant 8.000000e+00 : f32
    %43 = arith.divf %42, %cst_26 : f32
    %c0_27 = arith.constant 0 : index
    %c0_28 = arith.constant 0 : index
    %44 = memref.load %arg4[%c0_27, %c0_28] : memref<1x1xf32, #tpu.memory_space<smem>>
    memref.store %43, %arg4[%c0_27, %c0_28] : memref<1x1xf32, #tpu.memory_space<smem>>
    %45 = arith.mulf %5, %5 : vector<8x128xf32>
    %cst_29 = arith.constant dense<0.000000e+00> : vector<8xf32>
    %46 = vector.multi_reduction <add>, %45, %cst_29 [1] : vector<8x128xf32> to vector<8xf32>
    %47 = vector.shape_cast %46 : vector<8xf32> to vector<8x1xf32>
    %48 = math.sqrt %47 : vector<8x1xf32>
    %49 = vector.shape_cast %48 : vector<8x1xf32> to vector<1x8x1xf32>
    %cst_30 = arith.constant dense<0.000000e+00> : vector<1xf32>
    %50 = vector.multi_reduction <add>, %49, %cst_30 [1, 2] : vector<1x8x1xf32> to vector<1xf32>
    %51 = vector.shape_cast %50 : vector<1xf32> to vector<1x1x1xf32>
    %52 = vector.extract %51[0, 0, 0] : f32 from vector<1x1x1xf32>
    %cst_31 = arith.constant 8.000000e+00 : f32
    %53 = arith.divf %52, %cst_31 : f32
    %c0_32 = arith.constant 0 : index
    %c0_33 = arith.constant 0 : index
    %54 = memref.load %arg5[%c0_32, %c0_33] : memref<1x1xf32, #tpu.memory_space<smem>>
    memref.store %53, %arg5[%c0_32, %c0_33] : memref<1x1xf32, #tpu.memory_space<smem>>
    %55 = arith.mulf %9, %7 : vector<8x128xf32>
    %cst_34 = arith.constant dense<0.000000e+00> : vector<8xf32>
    %56 = vector.multi_reduction <add>, %55, %cst_34 [1] : vector<8x128xf32> to vector<8xf32>
    %57 = vector.shape_cast %56 : vector<8xf32> to vector<8x1xf32>
    %58 = arith.mulf %9, %9 : vector<8x128xf32>
    %cst_35 = arith.constant dense<0.000000e+00> : vector<8xf32>
    %59 = vector.multi_reduction <add>, %58, %cst_35 [1] : vector<8x128xf32> to vector<8xf32>
    %60 = vector.shape_cast %59 : vector<8xf32> to vector<8x1xf32>
    %cst_36 = arith.constant 1.000000e-16 : f32
    %61 = vector.broadcast %cst_36 : f32 to vector<8x1xf32>
    %62 = arith.maximumf %60, %61 : vector<8x1xf32>
    %63 = math.rsqrt %62 : vector<8x1xf32>
    %64 = arith.mulf %7, %7 : vector<8x128xf32>
    %cst_37 = arith.constant dense<0.000000e+00> : vector<8xf32>
    %65 = vector.multi_reduction <add>, %64, %cst_37 [1] : vector<8x128xf32> to vector<8xf32>
    %66 = vector.shape_cast %65 : vector<8xf32> to vector<8x1xf32>
    %cst_38 = arith.constant 1.000000e-16 : f32
    %67 = vector.broadcast %cst_38 : f32 to vector<8x1xf32>
    %68 = arith.maximumf %66, %67 : vector<8x1xf32>
    %69 = math.rsqrt %68 : vector<8x1xf32>
    %70 = arith.mulf %57, %63 : vector<8x1xf32>
    %71 = arith.mulf %70, %69 : vector<8x1xf32>
    %72 = vector.shape_cast %71 : vector<8x1xf32> to vector<1x8x1xf32>
    %cst_39 = arith.constant dense<0.000000e+00> : vector<1xf32>
    %73 = vector.multi_reduction <add>, %72, %cst_39 [1, 2] : vector<1x8x1xf32> to vector<1xf32>
    %74 = vector.shape_cast %73 : vector<1xf32> to vector<1x1x1xf32>
    %75 = vector.extract %74[0, 0, 0] : f32 from vector<1x1x1xf32>
    %cst_40 = arith.constant 8.000000e+00 : f32
    %76 = arith.divf %75, %cst_40 : f32
    %77 = arith.mulf %11, %5 : vector<8x128xf32>
    %cst_41 = arith.constant dense<0.000000e+00> : vector<8xf32>
    %78 = vector.multi_reduction <add>, %77, %cst_41 [1] : vector<8x128xf32> to vector<8xf32>
    %79 = vector.shape_cast %78 : vector<8xf32> to vector<8x1xf32>
    %80 = arith.mulf %11, %11 : vector<8x128xf32>
    %cst_42 = arith.constant dense<0.000000e+00> : vector<8xf32>
    %81 = vector.multi_reduction <add>, %80, %cst_42 [1] : vector<8x128xf32> to vector<8xf32>
    %82 = vector.shape_cast %81 : vector<8xf32> to vector<8x1xf32>
    %cst_43 = arith.constant 1.000000e-16 : f32
    %83 = vector.broadcast %cst_43 : f32 to vector<8x1xf32>
    %84 = arith.maximumf %82, %83 : vector<8x1xf32>
    %85 = math.rsqrt %84 : vector<8x1xf32>
    %86 = arith.mulf %5, %5 : vector<8x128xf32>
    %cst_44 = arith.constant dense<0.000000e+00> : vector<8xf32>
    %87 = vector.multi_reduction <add>, %86, %cst_44 [1] : vector<8x128xf32> to vector<8xf32>
    %88 = vector.shape_cast %87 : vector<8xf32> to vector<8x1xf32>
    %cst_45 = arith.constant 1.000000e-16 : f32
    %89 = vector.broadcast %cst_45 : f32 to vector<8x1xf32>
    %90 = arith.maximumf %88, %89 : vector<8x1xf32>
    %91 = math.rsqrt %90 : vector<8x1xf32>
    %92 = arith.mulf %79, %85 : vector<8x1xf32>
    %93 = arith.mulf %92, %91 : vector<8x1xf32>
    %94 = vector.shape_cast %93 : vector<8x1xf32> to vector<1x8x1xf32>
    %cst_46 = arith.constant dense<0.000000e+00> : vector<1xf32>
    %95 = vector.multi_reduction <add>, %94, %cst_46 [1, 2] : vector<1x8x1xf32> to vector<1xf32>
    %96 = vector.shape_cast %95 : vector<1xf32> to vector<1x1x1xf32>
    %97 = vector.extract %96[0, 0, 0] : f32 from vector<1x1x1xf32>
    %cst_47 = arith.constant 8.000000e+00 : f32
    %98 = arith.divf %97, %cst_47 : f32
    %99 = arith.addf %76, %98 : f32
    %cst_48 = arith.constant -5.000000e-01 : f32
    %100 = arith.mulf %cst_48, %99 : f32
    %c0_49 = arith.constant 0 : index
    %c0_50 = arith.constant 0 : index
    %101 = memref.load %arg6[%c0_49, %c0_50] : memref<1x1xf32, #tpu.memory_space<smem>>
    memref.store %100, %arg6[%c0_49, %c0_50] : memref<1x1xf32, #tpu.memory_space<smem>>
    return
  }
}

</mosaic_0001>

<llo_original>
// kernel: test_head_forward.3
$region0: #{test_head_forward.3}
  #allocation0 [shape = 'u32[]', space=smem, size = 0x4, offset = 0x4, fixed_abs, tag = 'smem constant byte address 0x4 - core index']
  #allocation1 [shape = 'u32[144,128]{1,0:T(1,128)}', space=vmem, size = 0x12000, scoped, tag = 'internal scratch']
  %s0 = inlined_call_operand.vmem [shape: f32[2,8,128], index: 0, kind: input, shape index: {}]
  %s1 = inlined_call_operand.vmem [shape: f32[2,8,128], index: 1, kind: input, shape index: {}]
  %s2 = inlined_call_operand.vmem [shape: f32[2,8,128], index: 2, kind: input, shape index: {}]
  %s3 = inlined_call_operand.hbm [shape: f32[1,1], index: 3, kind: output, shape index: {0}]
  %s4 = inlined_call_operand.hbm [shape: f32[1,1], index: 4, kind: output, shape index: {1}]
  %s5 = inlined_call_operand.hbm [shape: f32[1,1], index: 5, kind: output, shape index: {2}]
  %s6 = inlined_call_operand.hbm [shape: f32[1,1], index: 6, kind: output, shape index: {3}]
  %7 = xla_tuple %s3, %s4, %s5, %s6
  %s8 = sld [smem:[#allocation0]]
  $region46: #{test_head_forward.3} parent=0
    _
  %s10 = ssub.s32 1, %s8
  %s11 = scalar_select 0, %s10, %s8
  $region1: #{test_head_forward.3} parent=0
    #allocation2 [shape = 'u8[512]{0}', space=smem, size = 0x200, scoped, tag = 'output window, operand 0, single buffered']
    #allocation3 [shape = 's32[1]{0}', space=sflag, size = 0x4, scoped, tag = 'scoped memory for test_head_forward.3']
    #allocation4 [shape = 'u8[512]{0}', space=smem, size = 0x200, scoped, tag = 'output window, operand 1, single buffered']
    #allocation5 [shape = 's32[1]{0}', space=sflag, size = 0x4, scoped, tag = 'scoped memory for test_head_forward.3']
    #allocation6 [shape = 'u8[512]{0}', space=smem, size = 0x200, scoped, tag = 'output window, operand 2, single buffered']
    #allocation7 [shape = 'u8[512]{0}', space=smem, size = 0x200, scoped, tag = 'output window, operand 3, single buffered']
    #allocation8 [shape = 's32[1]{0}', space=sflag, size = 0x4, scoped, tag = 'scoped memory for test_head_forward.3']
    %12 = vsyncpa [#allocation3], 0
    %13 = vsyncpa [#allocation5], 0
    %14 = vsyncpa [#allocation8], 0
    // Predicated region
    $region2: #{test_head_forward.3} parent=1 // pred_check
      _
    $region3: #{test_head_forward.3} parent=1 // pred_check_branch
      %16 = sbr.rel (0) target = $region5
    $region4: #{test_head_forward.3} parent=1 // pred_region
      _
    $region5: #{test_head_forward.3} parent=1 // pred_fallthru
      _
    // Predicated region
    $region6: #{test_head_forward.3} parent=1 // pred_check
      _
    $region7: #{test_head_forward.3} parent=1 // pred_check_branch
      %18 = sbr.rel (0) target = $region9
    $region8: #{test_head_forward.3} parent=1 // pred_region
      _
    $region9: #{test_head_forward.3} parent=1 // pred_fallthru
      _
    // Predicated region
    $region10: #{test_head_forward.3} parent=1 // pred_check
      _
    $region11: #{test_head_forward.3} parent=1 // pred_check_branch
      %20 = sbr.rel (0) target = $region13
    $region12: #{test_head_forward.3} parent=1 // pred_region
      _
    $region13: #{test_head_forward.3} parent=1 // pred_fallthru
      _
    %v21 = vld [vmem:[%s0] sm:$0xff]
    %s22 = scalar_lea.vmem %s0, 8
    %v23 = vld [vmem:[%s22] sm:$0xff]
    %v24 = vld [vmem:[%s1] sm:$0xff]
    %s25 = scalar_lea.vmem %s1, 8
    %v26 = vld [vmem:[%s25] sm:$0xff]
    %v27 = vld [vmem:[%s2] sm:$0xff]
    %s28 = scalar_lea.vmem %s2, 8
    %v29 = vld [vmem:[%s28] sm:$0xff]
    %v30 = vmul.f32 %v21, %v23
    %31 = vadd.xlane.f32.xlu0 %v30
    %v32 = vpop.xlane.xlu0 %31
    %v33 = vmul.f32 %v21, %v21
    %34 = vadd.xlane.f32.xlu0 %v33
    %v35 = vpop.xlane.xlu0 %34
    %v36 = vmax.f32 %v35, 1e-16
    %v37 = vrsqrt.pop %v36
    %v38 = vmul.f32 %v23, %v23
    %39 = vadd.xlane.f32.xlu0 %v38
    %v40 = vpop.xlane.xlu0 %39
    %v41 = vmax.f32 %v40, 1e-16
    %v42 = vrsqrt.pop %v41
    %v43 = vmul.f32 %v32, %v37
    %v44 = vmul.f32 %v43, %v42
    %vm45 = vcmask 7168
    %v46 = vsel %vm45, %v44, 0.0
    %47 = vadd.xlane.f32.xlu0 %v46
    %v48 = vpop.xlane.xlu0 %47
    %v49 = vrot.slane %v48, 4
    %v50 = vadd.f32 %v48, %v49
    %v51 = vrot.slane %v50, 2
    %v52 = vadd.f32 %v50, %v51
    %v53 = vrot.slane %v52, 1
    %v54 = vadd.f32 %v52, %v53
    %s55 = vtos %v54
    %v56 = vrcp.pop 8.0
    %s57 = vtos %v56
    %s58 = smul.f32 %s55, %s57
    %s59 = scalar_lea.smem [#allocation2], 0
    %60 = sst [smem:[%s59]] %s58
    %v61 = vmul.f32 %v27, %v27
    %62 = vadd.xlane.f32.xlu0 %v61
    %v63 = vpop.xlane.xlu0 %62
    %v64 = vrsqrt.pop %v63
    %v65 = vmul.f32 %v63, %v64
    %vm66 = vcmp.eq.f32.partialorder %v63, inf
    %v67 = vsel %vm66, %v63, %v65
    %vm68 = vcmp.eq.f32.partialorder %v63, 0.0
    %v69 = vand.u32 %v63, 2147483648
    %v70 = vsel %vm68, %v69, %v67
    %v71 = vsel %vm45, %v70, 0.0
    %72 = vadd.xlane.f32.xlu0 %v71
    %v73 = vpop.xlane.xlu0 %72
    %v74 = vrot.slane %v73, 4
    %v75 = vadd.f32 %v73, %v74
    %v76 = vrot.slane %v75, 2
    %v77 = vadd.f32 %v75, %v76
    %v78 = vrot.slane %v77, 1
    %v79 = vadd.f32 %v77, %v78
    %s80 = vtos %v79
    %v81 = vrcp.pop 8.0
    %s82 = vtos %v81
    %s83 = smul.f32 %s80, %s82
    %s84 = scalar_lea.smem [#allocation4], 0
    %85 = sst [smem:[%s84]] %s83
    %v86 = vmul.f32 %v24, %v24
    %87 = vadd.xlane.f32.xlu0 %v86
    %v88 = vpop.xlane.xlu0 %87
    %v89 = vrsqrt.pop %v88
    %v90 = vmul.f32 %v88, %v89
    %vm91 = vcmp.eq.f32.partialorder %v88, inf
    %v92 = vsel %vm91, %v88, %v90
    %vm93 = vcmp.eq.f32.partialorder %v88, 0.0
    %v94 = vand.u32 %v88, 2147483648
    %v95 = vsel %vm93, %v94, %v92
    %v96 = vsel %vm45, %v95, 0.0
    %97 = vadd.xlane.f32.xlu0 %v96
    %v98 = vpop.xlane.xlu0 %97
    %v99 = vrot.slane %v98, 4
    %v100 = vadd.f32 %v98, %v99
    %v101 = vrot.slane %v100, 2
    %v102 = vadd.f32 %v100, %v101
    %v103 = vrot.slane %v102, 1
    %v104 = vadd.f32 %v102, %v103
    %s105 = vtos %v104
    %v106 = vrcp.pop 8.0
    %s107 = vtos %v106
    %s108 = smul.f32 %s105, %s107
    %s109 = scalar_lea.smem [#allocation6], 0
    %110 = sst [smem:[%s109]] %s108
    %v111 = vmul.f32 %v27, %v26
    %112 = vadd.xlane.f32.xlu0 %v111
    %v113 = vpop.xlane.xlu0 %112
    %v114 = vmax.f32 %v63, 1e-16
    %v115 = vrsqrt.pop %v114
    %v116 = vmul.f32 %v26, %v26
    %117 = vadd.xlane.f32.xlu0 %v116
    %v118 = vpop.xlane.xlu0 %117
    %v119 = vmax.f32 %v118, 1e-16
    %v120 = vrsqrt.pop %v119
    %v121 = vmul.f32 %v113, %v115
    %v122 = vmul.f32 %v121, %v120
    %v123 = vsel %vm45, %v122, 0.0
    %124 = vadd.xlane.f32.xlu0 %v123
    %v125 = vpop.xlane.xlu0 %124
    %v126 = vrot.slane %v125, 4
    %v127 = vadd.f32 %v125, %v126
    %v128 = vrot.slane %v127, 2
    %v129 = vadd.f32 %v127, %v128
    %v130 = vrot.slane %v129, 1
    %v131 = vadd.f32 %v129, %v130
    %s132 = vtos %v131
    %v133 = vrcp.pop 8.0
    %s134 = vtos %v133
    %s135 = smul.f32 %s132, %s134
    %v136 = vmul.f32 %v29, %v24
    %137 = vadd.xlane.f32.xlu0 %v136
    %v138 = vpop.xlane.xlu0 %137
    %v139 = vmul.f32 %v29, %v29
    %140 = vadd.xlane.f32.xlu0 %v139
    %v141 = vpop.xlane.xlu0 %140
    %v142 = vmax.f32 %v141, 1e-16
    %v143 = vrsqrt.pop %v142
    %v144 = vmax.f32 %v88, 1e-16
    %v145 = vrsqrt.pop %v144
    %v146 = vmul.f32 %v138, %v143
    %v147 = vmul.f32 %v146, %v145
    %v148 = vsel %vm45, %v147, 0.0
    %149 = vadd.xlane.f32.xlu0 %v148
    %v150 = vpop.xlane.xlu0 %149
    %v151 = vrot.slane %v150, 4
    %v152 = vadd.f32 %v150, %v151
    %v153 = vrot.slane %v152, 2
    %v154 = vadd.f32 %v152, %v153
    %v155 = vrot.slane %v154, 1
    %v156 = vadd.f32 %v154, %v155
    %s157 = vtos %v156
    %v158 = vrcp.pop 8.0
    %s159 = vtos %v158
    %s160 = smul.f32 %s157, %s159
    %s161 = sadd.f32 %s135, %s160
    %s162 = smul.f32 %s161, -0.5
    %s163 = scalar_lea.smem [#allocation7], 0
    %164 = sst [smem:[%s163]] %s162
    // Predicated region
    $region14: #{test_head_forward.3} parent=1 // pred_check
      _
    $region15: #{test_head_forward.3} parent=1 // pred_check_branch
      %166 = sbr.rel (0) target = $region17
    $region16: #{test_head_forward.3} parent=1 // pred_region
      %s168 = ssub.s32 16, 16
      %169 = vsyncadd [#allocation3], %s168
      %172 = dma.smem_to_hbm [#allocation2], 16, %s3, [#allocation3]
    $region17: #{test_head_forward.3} parent=1 // pred_fallthru
      _
    // Predicated region
    $region18: #{test_head_forward.3} parent=1 // pred_check
      _
    $region19: #{test_head_forward.3} parent=1 // pred_check_branch
      %174 = sbr.rel (0) target = $region21
    $region20: #{test_head_forward.3} parent=1 // pred_region
      %s176 = ssub.s32 16, 16
      %177 = vsyncadd [#allocation5], %s176
      %180 = dma.smem_to_hbm [#allocation4], 16, %s4, [#allocation5]
    $region21: #{test_head_forward.3} parent=1 // pred_fallthru
      _
    // Predicated region
    $region22: #{test_head_forward.3} parent=1 // pred_check
      _
    $region23: #{test_head_forward.3} parent=1 // pred_check_branch
      %182 = sbr.rel (0) target = $region25
    $region24: #{test_head_forward.3} parent=1 // pred_region
      %s184 = ssub.s32 16, 16
      %185 = vsyncadd [#allocation5], %s184
      %188 = dma.smem_to_hbm [#allocation6], 16, %s5, [#allocation5]
    $region25: #{test_head_forward.3} parent=1 // pred_fallthru
      _
    // Predicated region
    $region26: #{test_head_forward.3} parent=1 // pred_check
      _
    $region27: #{test_head_forward.3} parent=1 // pred_check_branch
      %190 = sbr.rel (0) target = $region29
    $region28: #{test_head_forward.3} parent=1 // pred_region
      %s192 = ssub.s32 16, 16
      %193 = vsyncadd [#allocation8], %s192
      %196 = dma.smem_to_hbm [#allocation7], 16, %s6, [#allocation8]
    $region29: #{test_head_forward.3} parent=1 // pred_fallthru
      _
    // Predicated region
    $region30: #{test_head_forward.3} parent=1 // pred_check
      _
    $region31: #{test_head_forward.3} parent=1 // pred_check_branch
      %198 = sbr.rel (0) target = $region33
    $region32: #{test_head_forward.3} parent=1 // pred_region
      %199 = dma.done [#allocation3], 16
    $region33: #{test_head_forward.3} parent=1 // pred_fallthru
      _
    // Predicated region
    $region34: #{test_head_forward.3} parent=1 // pred_check
      _
    $region35: #{test_head_forward.3} parent=1 // pred_check_branch
      %201 = sbr.rel (0) target = $region37
    $region36: #{test_head_forward.3} parent=1 // pred_region
      %202 = dma.done [#allocation5], 16
    $region37: #{test_head_forward.3} parent=1 // pred_fallthru
      _
    // Predicated region
    $region38: #{test_head_forward.3} parent=1 // pred_check
      _
    $region39: #{test_head_forward.3} parent=1 // pred_check_branch
      %204 = sbr.rel (0) target = $region41
    $region40: #{test_head_forward.3} parent=1 // pred_region
      %205 = dma.done [#allocation5], 16
    $region41: #{test_head_forward.3} parent=1 // pred_fallthru
      _
    // Predicated region
    $region42: #{test_head_forward.3} parent=1 // pred_check
      _
    $region43: #{test_head_forward.3} parent=1 // pred_check_branch
      %207 = sbr.rel (0) target = $region45
    $region44: #{test_head_forward.3} parent=1 // pred_region
      %208 = dma.done [#allocation8], 16
    $region45: #{test_head_forward.3} parent=1 // pred_fallthru
      _
    %209 = sfence
    %210 = vsyncpa [#allocation3], 1
    %211 = vsyncpa [#allocation5], 1
    %212 = vsyncpa [#allocation8], 1

// kernel: test_head_forward.2
$region0: #{test_head_forward.2}
  #allocation0 [shape = 'u32[]', space=smem, size = 0x4, offset = 0x4, fixed_abs, tag = 'smem constant byte address 0x4 - core index']
  #allocation1 [shape = 'u32[144,128]{1,0:T(1,128)}', space=vmem, size = 0x12000, scoped, tag = 'internal scratch']
  %s0 = inlined_call_operand.vmem [shape: f32[2,8,128], index: 0, kind: input, shape index: {}]
  %s1 = inlined_call_operand.vmem [shape: bf16[128,128], index: 1, kind: input, shape index: {}]
  %s2 = inlined_call_operand.vmem [shape: f32[1,128], index: 2, kind: input, shape index: {}]
  %s3 = inlined_call_operand.vmem [shape: f32[1,128], index: 3, kind: input, shape index: {}]
  %s4 = inlined_call_operand.vmem [shape: bf16[128,128], index: 4, kind: input, shape index: {}]
  %s5 = inlined_call_operand.vmem [shape: bf16[128,128], index: 5, kind: input, shape index: {}]
  %s6 = inlined_call_operand.vmem [shape: f32[1,128], index: 6, kind: input, shape index: {}]
  %s7 = inlined_call_operand.vmem [shape: f32[1,128], index: 7, kind: input, shape index: {}]
  %s8 = inlined_call_operand.vmem [shape: bf16[128,128], index: 8, kind: input, shape index: {}]
  %s9 = inlined_call_operand.vmem [shape: f32[1,128], index: 9, kind: input, shape index: {}]
  %s10 = inlined_call_operand.vmem [shape: f32[2,8,128], index: 10, kind: output, shape index: {0}]
  %s11 = inlined_call_operand.vmem [shape: f32[2,8,128], index: 11, kind: output, shape index: {1}]
  %12 = xla_tuple %s10, %s11
  %s13 = sld [smem:[#allocation0]]
  $region81: #{test_head_forward.2} parent=0
    _
  %s15 = ssub.s32 1, %s13
  %s16 = scalar_select 0, %s15, %s13
  loop: start=0, step=1, limit=4
  $region2: #{test_head_forward.2} parent=0 // loop_pre_header
    _
  $region3: #{test_head_forward.2} parent=0 // loop_header
    %s18 = sphi 0, %s22
    %p19 = scmp.ge.s32.totalorder %s18, 4
    %s28 = sphi 0, %s30
    %s31 = sphi 0, %s28
    %s32 = sphi 0, %s31
    %s48 = sphi 0, %s32
    %s52 = sphi 0, %s52
    %s54 = sphi 0, %s52
    %s55 = sphi 0, %s54
    %s69 = sphi 0, %s55
    %s73 = sphi 0, %s73
    %s75 = sphi 0, %s73
    %s76 = sphi 0, %s75
    %s90 = sphi 0, %s76
    %s94 = sphi 0, %s94
    %s96 = sphi 0, %s94
    %s97 = sphi 0, %s96
    %s111 = sphi 0, %s97
    %s115 = sphi 0, %s115
    %s117 = sphi 0, %s115
    %s118 = sphi 0, %s117
    %s132 = sphi 0, %s118
    %s136 = sphi 0, %s136
    %s138 = sphi 0, %s136
    %s139 = sphi 0, %s138
    %s153 = sphi 0, %s139
    %s157 = sphi 0, %s157
    %s159 = sphi 0, %s157
    %s160 = sphi 0, %s159
    %s174 = sphi 0, %s160
    %s178 = sphi 0, %s178
    %s180 = sphi 0, %s178
    %s181 = sphi 0, %s180
    %s195 = sphi 0, %s181
    %s199 = sphi 0, %s199
    %s201 = sphi 0, %s199
    %s202 = sphi 0, %s201
    %s216 = sphi 0, %s202
    %s220 = sphi 0, %s220
    %s222 = sphi 0, %s220
    %s223 = sphi 0, %s222
    %s237 = sphi 0, %s223
    %s243 = sphi 0, %s245
    %s246 = sphi 0, %s243
    %s247 = sphi 0, %s246
    %s263 = sphi 0, %s247
    %s269 = sphi 0, %s271
    %s272 = sphi 0, %s269
    %s273 = sphi 0, %s272
    %s289 = sphi 0, %s273
  $region4: #{test_head_forward.2} parent=0 // loop_header_branch
    %21 = sbr.rel (%p19) target = $region8
  $region5: #{test_head_forward.2} parent=0 // loop_body
    %s23 = ssub.s32 %s18, 1
    %s24 = ssub.s32 %s18, 2
    %s25 = sadd.s32 %s18, 1
    %s26 = ssub.s32 %s18, %s25
    %p27 = scmp.eq.s32.totalorder %s26, 0
    %s29 = sadd.s32 %s28, 1
    %s30 = scalar_select %p27, %s28, %s29
    %p33 = pneg %p27
    %p34 = scmp.eq.s32.totalorder %s18, 1
    %p35 = por %p33, %p34
    %p36 = scmp.ne.s32.totalorder %s28, %s31
    %p37 = scmp.eq.s32.totalorder %s18, 0
    %p38 = por %p36, %p37
    %p39 = scmp.ne.s32.totalorder %s28, %s31
    %p40 = scmp.eq.s32.totalorder %s23, 1
    %p41 = por %p39, %p40
    %p42 = scmp.ne.s32.totalorder %s31, %s32
    %p43 = scmp.eq.s32.totalorder %s23, 0
    %p44 = por %p42, %p43
    %p45 = scmp.ne.s32.totalorder %s31, %s32
    %p46 = scmp.eq.s32.totalorder %s24, 1
    %p47 = por %p45, %p46
    %p49 = scmp.ne.s32.totalorder %s32, %s48
    %p50 = scmp.eq.s32.totalorder %s24, 0
    %p51 = por %p49, %p50
    %s53 = sadd.s32 %s52, 1
    %p56 = scmp.eq.s32.totalorder %s18, 1
    %p57 = scmp.ne.s32.totalorder %s52, %s54
    %p58 = scmp.eq.s32.totalorder %s18, 0
    %p59 = por %p57, %p58
    %p60 = scmp.ne.s32.totalorder %s52, %s54
    %p61 = scmp.eq.s32.totalorder %s23, 1
    %p62 = por %p60, %p61
    %p63 = scmp.ne.s32.totalorder %s54, %s55
    %p64 = scmp.eq.s32.totalorder %s23, 0
    %p65 = por %p63, %p64
    %p66 = scmp.ne.s32.totalorder %s54, %s55
    %p67 = scmp.eq.s32.totalorder %s24, 1
    %p68 = por %p66, %p67
    %p70 = scmp.ne.s32.totalorder %s55, %s69
    %p71 = scmp.eq.s32.totalorder %s24, 0
    %p72 = por %p70, %p71
    %s74 = sadd.s32 %s73, 1
    %p77 = scmp.eq.s32.totalorder %s18, 1
    %p78 = scmp.ne.s32.totalorder %s73, %s75
    %p79 = scmp.eq.s32.totalorder %s18, 0
    %p80 = por %p78, %p79
    %p81 = scmp.ne.s32.totalorder %s73, %s75
    %p82 = scmp.eq.s32.totalorder %s23, 1
    %p83 = por %p81, %p82
    %p84 = scmp.ne.s32.totalorder %s75, %s76
    %p85 = scmp.eq.s32.totalorder %s23, 0
    %p86 = por %p84, %p85
    %p87 = scmp.ne.s32.totalorder %s75, %s76
    %p88 = scmp.eq.s32.totalorder %s24, 1
    %p89 = por %p87, %p88
    %p91 = scmp.ne.s32.totalorder %s76, %s90
    %p92 = scmp.eq.s32.totalorder %s24, 0
    %p93 = por %p91, %p92
    %s95 = sadd.s32 %s94, 1
    %p98 = scmp.eq.s32.totalorder %s18, 1
    %p99 = scmp.ne.s32.totalorder %s94, %s96
    %p100 = scmp.eq.s32.totalorder %s18, 0
    %p101 = por %p99, %p100
    %p102 = scmp.ne.s32.totalorder %s94, %s96
    %p103 = scmp.eq.s32.totalorder %s23, 1
    %p104 = por %p102, %p103
    %p105 = scmp.ne.s32.totalorder %s96, %s97
    %p106 = scmp.eq.s32.totalorder %s23, 0
    %p107 = por %p105, %p106
    %p108 = scmp.ne.s32.totalorder %s96, %s97
    %p109 = scmp.eq.s32.totalorder %s24, 1
    %p110 = por %p108, %p109
    %p112 = scmp.ne.s32.totalorder %s97, %s111
    %p113 = scmp.eq.s32.totalorder %s24, 0
    %p114 = por %p112, %p113
    %s116 = sadd.s32 %s115, 1
    %p119 = scmp.eq.s32.totalorder %s18, 1
    %p120 = scmp.ne.s32.totalorder %s115, %s117
    %p121 = scmp.eq.s32.totalorder %s18, 0
    %p122 = por %p120, %p121
    %p123 = scmp.ne.s32.totalorder %s115, %s117
    %p124 = scmp.eq.s32.totalorder %s23, 1
    %p125 = por %p123, %p124
    %p126 = scmp.ne.s32.totalorder %s117, %s118
    %p127 = scmp.eq.s32.totalorder %s23, 0
    %p128 = por %p126, %p127
    %p129 = scmp.ne.s32.totalorder %s117, %s118
    %p130 = scmp.eq.s32.totalorder %s24, 1
    %p131 = por %p129, %p130
    %p133 = scmp.ne.s32.totalorder %s118, %s132
    %p134 = scmp.eq.s32.totalorder %s24, 0
    %p135 = por %p133, %p134
    %s137 = sadd.s32 %s136, 1
    %p140 = scmp.eq.s32.totalorder %s18, 1
    %p141 = scmp.ne.s32.totalorder %s136, %s138
    %p142 = scmp.eq.s32.totalorder %s18, 0
    %p143 = por %p141, %p142
    %p144 = scmp.ne.s32.totalorder %s136, %s138
    %p145 = scmp.eq.s32.totalorder %s23, 1
    %p146 = por %p144, %p145
    %p147 = scmp.ne.s32.totalorder %s138, %s139
    %p148 = scmp.eq.s32.totalorder %s23, 0
    %p149 = por %p147, %p148
    %p150 = scmp.ne.s32.totalorder %s138, %s139
    %p151 = scmp.eq.s32.totalorder %s24, 1
    %p152 = por %p150, %p151
    %p154 = scmp.ne.s32.totalorder %s139, %s153
    %p155 = scmp.eq.s32.totalorder %s24, 0
    %p156 = por %p154, %p155
    %s158 = sadd.s32 %s157, 1
    %p161 = scmp.eq.s32.totalorder %s18, 1
    %p162 = scmp.ne.s32.totalorder %s157, %s159
    %p163 = scmp.eq.s32.totalorder %s18, 0
    %p164 = por %p162, %p163
    %p165 = scmp.ne.s32.totalorder %s157, %s159
    %p166 = scmp.eq.s32.totalorder %s23, 1
    %p167 = por %p165, %p166
    %p168 = scmp.ne.s32.totalorder %s159, %s160
    %p169 = scmp.eq.s32.totalorder %s23, 0
    %p170 = por %p168, %p169
    %p171 = scmp.ne.s32.totalorder %s159, %s160
    %p172 = scmp.eq.s32.totalorder %s24, 1
    %p173 = por %p171, %p172
    %p175 = scmp.ne.s32.totalorder %s160, %s174
    %p176 = scmp.eq.s32.totalorder %s24, 0
    %p177 = por %p175, %p176
    %s179 = sadd.s32 %s178, 1
    %p182 = scmp.eq.s32.totalorder %s18, 1
    %p183 = scmp.ne.s32.totalorder %s178, %s180
    %p184 = scmp.eq.s32.totalorder %s18, 0
    %p185 = por %p183, %p184
    %p186 = scmp.ne.s32.totalorder %s178, %s180
    %p187 = scmp.eq.s32.totalorder %s23, 1
    %p188 = por %p186, %p187
    %p189 = scmp.ne.s32.totalorder %s180, %s181
    %p190 = scmp.eq.s32.totalorder %s23, 0
    %p191 = por %p189, %p190
    %p192 = scmp.ne.s32.totalorder %s180, %s181
    %p193 = scmp.eq.s32.totalorder %s24, 1
    %p194 = por %p192, %p193
    %p196 = scmp.ne.s32.totalorder %s181, %s195
    %p197 = scmp.eq.s32.totalorder %s24, 0
    %p198 = por %p196, %p197
    %s200 = sadd.s32 %s199, 1
    %p203 = scmp.eq.s32.totalorder %s18, 1
    %p204 = scmp.ne.s32.totalorder %s199, %s201
    %p205 = scmp.eq.s32.totalorder %s18, 0
    %p206 = por %p204, %p205
    %p207 = scmp.ne.s32.totalorder %s199, %s201
    %p208 = scmp.eq.s32.totalorder %s23, 1
    %p209 = por %p207, %p208
    %p210 = scmp.ne.s32.totalorder %s201, %s202
    %p211 = scmp.eq.s32.totalorder %s23, 0
    %p212 = por %p210, %p211
    %p213 = scmp.ne.s32.totalorder %s201, %s202
    %p214 = scmp.eq.s32.totalorder %s24, 1
    %p215 = por %p213, %p214
    %p217 = scmp.ne.s32.totalorder %s202, %s216
    %p218 = scmp.eq.s32.totalorder %s24, 0
    %p219 = por %p217, %p218
    %s221 = sadd.s32 %s220, 1
    %p224 = scmp.eq.s32.totalorder %s18, 1
    %p225 = scmp.ne.s32.totalorder %s220, %s222
    %p226 = scmp.eq.s32.totalorder %s18, 0
    %p227 = por %p225, %p226
    %p228 = scmp.ne.s32.totalorder %s220, %s222
    %p229 = scmp.eq.s32.totalorder %s23, 1
    %p230 = por %p228, %p229
    %p231 = scmp.ne.s32.totalorder %s222, %s223
    %p232 = scmp.eq.s32.totalorder %s23, 0
    %p233 = por %p231, %p232
    %p234 = scmp.ne.s32.totalorder %s222, %s223
    %p235 = scmp.eq.s32.totalorder %s24, 1
    %p236 = por %p234, %p235
    %p238 = scmp.ne.s32.totalorder %s223, %s237
    %p239 = scmp.eq.s32.totalorder %s24, 0
    %p240 = por %p238, %p239
    %s241 = ssub.s32 %s18, %s25
    %p242 = scmp.eq.s32.totalorder %s241, 0
    %s244 = sadd.s32 %s243, 1
    %s245 = scalar_select %p242, %s243, %s244
    %p248 = pneg %p242
    %p249 = scmp.eq.s32.totalorder %s18, 1
    %p250 = por %p248, %p249
    %p251 = scmp.ne.s32.totalorder %s243, %s246
    %p252 = scmp.eq.s32.totalorder %s18, 0
    %p253 = por %p251, %p252
    %p254 = scmp.ne.s32.totalorder %s243, %s246
    %p255 = scmp.eq.s32.totalorder %s23, 1
    %p256 = por %p254, %p255
    %p257 = scmp.ne.s32.totalorder %s246, %s247
    %p258 = scmp.eq.s32.totalorder %s23, 0
    %p259 = por %p257, %p258
    %p260 = scmp.ne.s32.totalorder %s246, %s247
    %p261 = scmp.eq.s32.totalorder %s24, 1
    %p262 = por %p260, %p261
    %p264 = scmp.ne.s32.totalorder %s247, %s263
    %p265 = scmp.eq.s32.totalorder %s24, 0
    %p266 = por %p264, %p265
    %s267 = ssub.s32 %s18, %s25
    %p268 = scmp.eq.s32.totalorder %s267, 0
    %s270 = sadd.s32 %s269, 1
    %s271 = scalar_select %p268, %s269, %s270
    %p274 = pneg %p268
    %p275 = scmp.eq.s32.totalorder %s18, 1
    %p276 = por %p274, %p275
    %p277 = scmp.ne.s32.totalorder %s269, %s272
    %p278 = scmp.eq.s32.totalorder %s18, 0
    %p279 = por %p277, %p278
    %p280 = scmp.ne.s32.totalorder %s269, %s272
    %p281 = scmp.eq.s32.totalorder %s23, 1
    %p282 = por %p280, %p281
    %p283 = scmp.ne.s32.totalorder %s272, %s273
    %p284 = scmp.eq.s32.totalorder %s23, 0
    %p285 = por %p283, %p284
    %p286 = scmp.ne.s32.totalorder %s272, %s273
    %p287 = scmp.eq.s32.totalorder %s24, 1
    %p288 = por %p286, %p287
    %p290 = scmp.ne.s32.totalorder %s273, %s289
    %p291 = scmp.eq.s32.totalorder %s24, 0
    %p292 = por %p290, %p291
    %p293 = scmp.le.s32.totalorder 1, %s18
    %p294 = scmp.lt.s32.totalorder %s18, 3
    %p295 = pnand %p293, %p294
    %p296 = pneg %p295
    // Predicated region
    $region9: #{test_head_forward.2} parent=5 // pred_check
      _
    $region10: #{test_head_forward.2} parent=5 // pred_check_branch
      %298 = sbr.rel (%p295) target = $region12
    $region11: #{test_head_forward.2} parent=5 // pred_region
      %s299 = ssub.s32 %s18, 1
      // Predicated region
      $region13: #{test_head_forward.2} parent=11 // pred_check
        %p300 = pneg %p65
      $region14: #{test_head_forward.2} parent=11 // pred_check_branch
        %302 = sbr.rel (%p300) target = $region16
      $region15: #{test_head_forward.2} parent=11 // pred_region
        _
      $region16: #{test_head_forward.2} parent=11 // pred_fallthru
        _
      // Predicated region
      $region17: #{test_head_forward.2} parent=11 // pred_check
        %p303 = pneg %p86
      $region18: #{test_head_forward.2} parent=11 // pred_check_branch
        %305 = sbr.rel (%p303) target = $region20
      $region19: #{test_head_forward.2} parent=11 // pred_region
        _
      $region20: #{test_head_forward.2} parent=11 // pred_fallthru
        _
      // Predicated region
      $region21: #{test_head_forward.2} parent=11 // pred_check
        %p306 = pneg %p107
      $region22: #{test_head_forward.2} parent=11 // pred_check_branch
        %308 = sbr.rel (%p306) target = $region24
      $region23: #{test_head_forward.2} parent=11 // pred_region
        _
      $region24: #{test_head_forward.2} parent=11 // pred_fallthru
        _
      // Predicated region
      $region25: #{test_head_forward.2} parent=11 // pred_check
        %p309 = pneg %p128
      $region26: #{test_head_forward.2} parent=11 // pred_check_branch
        %311 = sbr.rel (%p309) target = $region28
      $region27: #{test_head_forward.2} parent=11 // pred_region
        _
      $region28: #{test_head_forward.2} parent=11 // pred_fallthru
        _
      // Predicated region
      $region29: #{test_head_forward.2} parent=11 // pred_check
        %p312 = pneg %p149
      $region30: #{test_head_forward.2} parent=11 // pred_check_branch
        %314 = sbr.rel (%p312) target = $region32
      $region31: #{test_head_forward.2} parent=11 // pred_region
        _
      $region32: #{test_head_forward.2} parent=11 // pred_fallthru
        _
      // Predicated region
      $region33: #{test_head_forward.2} parent=11 // pred_check
        %p315 = pneg %p170
      $region34: #{test_head_forward.2} parent=11 // pred_check_branch
        %317 = sbr.rel (%p315) target = $region36
      $region35: #{test_head_forward.2} parent=11 // pred_region
        _
      $region36: #{test_head_forward.2} parent=11 // pred_fallthru
        _
      // Predicated region
      $region37: #{test_head_forward.2} parent=11 // pred_check
        %p318 = pneg %p191
      $region38: #{test_head_forward.2} parent=11 // pred_check_branch
        %320 = sbr.rel (%p318) target = $region40
      $region39: #{test_head_forward.2} parent=11 // pred_region
        _
      $region40: #{test_head_forward.2} parent=11 // pred_fallthru
        _
      // Predicated region
      $region41: #{test_head_forward.2} parent=11 // pred_check
        %p321 = pneg %p212
      $region42: #{test_head_forward.2} parent=11 // pred_check_branch
        %323 = sbr.rel (%p321) target = $region44
      $region43: #{test_head_forward.2} parent=11 // pred_region
        _
      $region44: #{test_head_forward.2} parent=11 // pred_fallthru
        _
      // Predicated region
      $region45: #{test_head_forward.2} parent=11 // pred_check
        %p324 = pneg %p233
      $region46: #{test_head_forward.2} parent=11 // pred_check_branch
        %326 = sbr.rel (%p324) target = $region48
      $region47: #{test_head_forward.2} parent=11 // pred_region
        _
      $region48: #{test_head_forward.2} parent=11 // pred_fallthru
        _
    $region12: #{test_head_forward.2} parent=5 // pred_fallthru
      _
    %p327 = scmp.lt.s32.totalorder %s18, 2
    // Predicated region
    $region49: #{test_head_forward.2} parent=5 // pred_check
      %p328 = pneg %p327
    $region50: #{test_head_forward.2} parent=5 // pred_check_branch
      %330 = sbr.rel (%p328) target = $region52
    $region51: #{test_head_forward.2} parent=5 // pred_region
      // Predicated region
      $region53: #{test_head_forward.2} parent=51 // pred_check
        %p331 = pneg %p38
      $region54: #{test_head_forward.2} parent=51 // pred_check_branch
        %333 = sbr.rel (%p331) target = $region56
      $region55: #{test_head_forward.2} parent=51 // pred_region
        %p334 = scmp.lt.s32.totalorder %s18, 1
        %s335 = scalar_select %p334, %s18, 1
        %s336 = smul.addr %s335, 8
        %s337 = scalar_lea.vmem %s0, %s336
      $region56: #{test_head_forward.2} parent=51 // pred_fallthru
        _
    $region52: #{test_head_forward.2} parent=5 // pred_fallthru
      _
    %p338 = scmp.le.s32.totalorder 1, %s18
    %p339 = scmp.lt.s32.totalorder %s18, 3
    %p340 = pnand %p338, %p339
    %p341 = pneg %p340
    // Predicated region
    $region57: #{test_head_forward.2} parent=5 // pred_check
      _
    $region58: #{test_head_forward.2} parent=5 // pred_check_branch
      %343 = sbr.rel (%p340) target = $region60
    $region59: #{test_head_forward.2} parent=5 // pred_region
      %s344 = ssub.s32 %s18, 1
      %p345 = scmp.lt.s32.totalorder %s23, 1
      %s346 = scalar_select %p345, %s23, 1
      %s347 = smul.addr %s346, 8
      %s348 = scalar_lea.vmem %s0, %s347
      %p349 = pneg %p44
      %p350 = pneg %p41
      %p351 = pneg %p65
      %p352 = pneg %p62
      %p353 = pneg %p86
      %p354 = pneg %p83
      %p355 = pneg %p107
      %p356 = pneg %p104
      %p357 = pneg %p128
      %p358 = pneg %p125
      %p359 = pneg %p149
      %p360 = pneg %p146
      %p361 = pneg %p170
      %p362 = pneg %p167
      %p363 = pneg %p191
      %p364 = pneg %p188
      %p365 = pneg %p212
      %p366 = pneg %p209
      %p367 = pneg %p233
      %p368 = pneg %p230
      %p369 = pneg %p259
      %p370 = pneg %p256
      %p371 = scmp.lt.s32.totalorder %s23, 1
      %s372 = scalar_select %p371, %s23, 1
      %s373 = smul.addr %s372, 8
      %s374 = scalar_lea.vmem %s10, %s373
      %p375 = pneg %p285
      %p376 = pneg %p282
      %p377 = scmp.lt.s32.totalorder %s23, 1
      %s378 = scalar_select %p377, %s23, 1
      %s379 = smul.addr %s378, 8
      %s380 = scalar_lea.vmem %s11, %s379
      %p381 = scmp.lt.s32.totalorder %s23, 1
      %s382 = scalar_select %p381, %s23, 1
      %s383 = smul.addr %s382, 8
      %s384 = scalar_lea.vmem %s0, %s383
      %p385 = scmp.lt.s32.totalorder %s23, 1
      %s386 = scalar_select %p385, %s23, 1
      %s387 = smul.addr %s386, 8
      %s388 = scalar_lea.vmem %s10, %s387
      %p389 = scmp.lt.s32.totalorder %s23, 1
      %s390 = scalar_select %p389, %s23, 1
      %s391 = smul.addr %s390, 8
      %s392 = scalar_lea.vmem %s11, %s391
      %v394 = vld [vmem:[%s384] sm:$0xff]
      %v395 = vpack.c.bf16 %v394, %v394
      %v396 = vld [vmem:[%s1] sm:$0xf]
      %v397 = vld [vmem:[%s1 + $0x4] sm:$0xf]
      %v398 = vld [vmem:[%s1 + $0x8] sm:$0xf]
      %v399 = vld [vmem:[%s1 + $0xc] sm:$0xf]
      %v400 = vld [vmem:[%s1 + $0x10] sm:$0xf]
      %v401 = vld [vmem:[%s1 + $0x14] sm:$0xf]
      %v402 = vld [vmem:[%s1 + $0x18] sm:$0xf]
      %v403 = vld [vmem:[%s1 + $0x1c] sm:$0xf]
      %v404 = vld [vmem:[%s1 + $0x20] sm:$0xf]
      %v405 = vld [vmem:[%s1 + $0x24] sm:$0xf]
      %v406 = vld [vmem:[%s1 + $0x28] sm:$0xf]
      %v407 = vld [vmem:[%s1 + $0x2c] sm:$0xf]
      %v408 = vld [vmem:[%s1 + $0x30] sm:$0xf]
      %v409 = vld [vmem:[%s1 + $0x34] sm:$0xf]
      %v410 = vld [vmem:[%s1 + $0x38] sm:$0xf]
      %v411 = vld [vmem:[%s1 + $0x3c] sm:$0xf]
      %v428 = vunpack.c.l.b16 %v396
      %v429 = vunpack.c.l.b16 %v397
      %v430 = vunpack.c.l.b16 %v398
      %v431 = vunpack.c.l.b16 %v399
      %v432 = vunpack.c.l.b16 %v400
      %v433 = vunpack.c.l.b16 %v401
      %v434 = vunpack.c.l.b16 %v402
      %v435 = vunpack.c.l.b16 %v403
      %v436 = vunpack.c.l.b16 %v404
      %v437 = vunpack.c.l.b16 %v405
      %v438 = vunpack.c.l.b16 %v406
      %v439 = vunpack.c.l.b16 %v407
      %v440 = vunpack.c.l.b16 %v408
      %v441 = vunpack.c.l.b16 %v409
      %v442 = vunpack.c.l.b16 %v410
      %v443 = vunpack.c.l.b16 %v411
      %v444 = vpack.c.b16 %v429, %v428
      %v445 = vpack.c.b16 %v431, %v430
      %v446 = vpack.c.b16 %v433, %v432
      %v447 = vpack.c.b16 %v435, %v434
      %v448 = vpack.c.b16 %v437, %v436
      %v449 = vpack.c.b16 %v439, %v438
      %v450 = vpack.c.b16 %v441, %v440
      %v451 = vpack.c.b16 %v443, %v442
      %460 = vmatprep.subr.bf16.mxu0 0
      %461 = vmatpush1.bf16.msra.mxu0 %v451
      %462 = vmatprep.subr.bf16.mxu0 0
      %463 = vmatpush1.bf16.msra.mxu0 %v450
      %464 = vmatprep.subr.bf16.mxu0 0
      %465 = vmatpush1.bf16.msra.mxu0 %v449
      %466 = vmatprep.subr.bf16.mxu0 0
      %467 = vmatpush1.bf16.msra.mxu0 %v448
      %468 = vmatprep.subr.bf16.mxu0 0
      %469 = vmatpush1.bf16.msra.mxu0 %v447
      %470 = vmatprep.subr.bf16.mxu0 0
      %471 = vmatpush1.bf16.msra.mxu0 %v446
      %472 = vmatprep.subr.bf16.mxu0 0
      %473 = vmatpush1.bf16.msra.mxu0 %v445
      %474 = vmatprep.subr.bf16.mxu0 0
      %475 = vmatpush1.bf16.msra.mxu0 %v444
      %476 = vmatprep.subr.bf16.mxu0 0
      %477 = vmatpush2.bf16.msra.mxu0 0
      %478 = vmatprep.subr.bf16.mxu0 0
      %479 = vmatpush2.bf16.msra.mxu0 0
      %480 = vmatprep.subr.bf16.mxu0 0
      %481 = vmatpush2.bf16.msra.mxu0 0
      %482 = vmatprep.subr.bf16.mxu0 0
      %483 = vmatpush2.bf16.msra.mxu0 0
      %484 = vmatprep.subr.bf16.mxu0 0
      %485 = vmatpush2.bf16.msra.mxu0 0
      %486 = vmatprep.subr.bf16.mxu0 0
      %487 = vmatpush2.bf16.msra.mxu0 0
      %488 = vmatprep.subr.bf16.mxu0 0
      %489 = vmatpush2.bf16.msra.mxu0 0
      %490 = vmatprep.subr.bf16.mxu0 0
      %491 = vmatpush2.bf16.msra.mxu0 0
      %492 = vmatprep.mubr.bf16.mxu0 0
      %493 = vmatmul.mubr.bf16.gmra.mxu0 %v395
      %v494 = vpop.f32.mrf.mxu0
      %v495 = vadd.f32 0.0, %v494
      %v496 = vpop.f32.mrf.mxu0
      %v497 = vpop.f32.mrf.mxu0
      %v498 = vpop.f32.mrf.mxu0
      %499 = vdwg.mxu0
      %v500 = vld [vmem:[%s2] sm:$0x1]
      %v501 = vld [vmem:[%s3] sm:$0x1]
      %v502 = vrot.slane %v495, 4
      %v503 = vadd.f32 %v495, %v502
      %v504 = vrot.slane %v503, 2
      %v505 = vadd.f32 %v503, %v504
      %v506 = vrot.slane %v505, 1
      %v507 = vadd.f32 %v505, %v506
      %v508 = vrcp.pop 8.0
      %v509 = vmul.f32 %v507, %v508
      %v510 = vsub.f32 %v495, %v509
      %v511 = vmul.f32 %v510, %v510
      %v512 = vrot.slane %v511, 4
      %v513 = vadd.f32 %v511, %v512
      %v514 = vrot.slane %v513, 2
      %v515 = vadd.f32 %v513, %v514
      %v516 = vrot.slane %v515, 1
      %v517 = vadd.f32 %v515, %v516
      %v518 = vmul.f32 %v517, %v508
      %v519 = vadd.f32 %v518, 1e-05
      %v520 = vrsqrt.pop %v519
      %v521 = vmul.f32 %v510, %v520
      %v523 = vlaneseq
      %v524 = vshrl.u32 %v523, 7
      %v525 = vsub.s32 0, %v524
      %v526 = vrot.slane %v500, %v525
      %v528 = vmul.f32 %v521, %v526
      %v530 = vlaneseq
      %v531 = vshrl.u32 %v530, 7
      %v532 = vsub.s32 0, %v531
      %v533 = vrot.slane %v501, %v532
      %v535 = vadd.f32 %v528, %v533
      %v536 = vmax.f32 %v535, 0.0
      %v537 = vpack.c.bf16 %v536, %v536
      %v538 = vld [vmem:[%s4] sm:$0xf]
      %v539 = vld [vmem:[%s4 + $0x4] sm:$0xf]
      %v540 = vld [vmem:[%s4 + $0x8] sm:$0xf]
      %v541 = vld [vmem:[%s4 + $0xc] sm:$0xf]
      %v542 = vld [vmem:[%s4 + $0x10] sm:$0xf]
      %v543 = vld [vmem:[%s4 + $0x14] sm:$0xf]
      %v544 = vld [vmem:[%s4 + $0x18] sm:$0xf]
      %v545 = vld [vmem:[%s4 + $0x1c] sm:$0xf]
      %v546 = vld [vmem:[%s4 + $0x20] sm:$0xf]
      %v547 = vld [vmem:[%s4 + $0x24] sm:$0xf]
      %v548 = vld [vmem:[%s4 + $0x28] sm:$0xf]
      %v549 = vld [vmem:[%s4 + $0x2c] sm:$0xf]
      %v550 = vld [vmem:[%s4 + $0x30] sm:$0xf]
      %v551 = vld [vmem:[%s4 + $0x34] sm:$0xf]
      %v552 = vld [vmem:[%s4 + $0x38] sm:$0xf]
      %v553 = vld [vmem:[%s4 + $0x3c] sm:$0xf]
      %v570 = vunpack.c.l.b16 %v538
      %v571 = vunpack.c.l.b16 %v539
      %v572 = vunpack.c.l.b16 %v540
      %v573 = vunpack.c.l.b16 %v541
      %v574 = vunpack.c.l.b16 %v542
      %v575 = vunpack.c.l.b16 %v543
      %v576 = vunpack.c.l.b16 %v544
      %v577 = vunpack.c.l.b16 %v545
      %v578 = vunpack.c.l.b16 %v546
      %v579 = vunpack.c.l.b16 %v547
      %v580 = vunpack.c.l.b16 %v548
      %v581 = vunpack.c.l.b16 %v549
      %v582 = vunpack.c.l.b16 %v550
      %v583 = vunpack.c.l.b16 %v551
      %v584 = vunpack.c.l.b16 %v552
      %v585 = vunpack.c.l.b16 %v553
      %v586 = vpack.c.b16 %v571, %v570
      %v587 = vpack.c.b16 %v573, %v572
      %v588 = vpack.c.b16 %v575, %v574
      %v589 = vpack.c.b16 %v577, %v576
      %v590 = vpack.c.b16 %v579, %v578
      %v591 = vpack.c.b16 %v581, %v580
      %v592 = vpack.c.b16 %v583, %v582
      %v593 = vpack.c.b16 %v585, %v584
      %602 = vmatprep.subr.bf16.mxu0 0
      %603 = vmatpush1.bf16.msra.mxu0 %v593
      %604 = vmatprep.subr.bf16.mxu0 0
      %605 = vmatpush1.bf16.msra.mxu0 %v592
      %606 = vmatprep.subr.bf16.mxu0 0
      %607 = vmatpush1.bf16.msra.mxu0 %v591
      %608 = vmatprep.subr.bf16.mxu0 0
      %609 = vmatpush1.bf16.msra.mxu0 %v590
      %610 = vmatprep.subr.bf16.mxu0 0
      %611 = vmatpush1.bf16.msra.mxu0 %v589
      %612 = vmatprep.subr.bf16.mxu0 0
      %613 = vmatpush1.bf16.msra.mxu0 %v588
      %614 = vmatprep.subr.bf16.mxu0 0
      %615 = vmatpush1.bf16.msra.mxu0 %v587
      %616 = vmatprep.subr.bf16.mxu0 0
      %617 = vmatpush1.bf16.msra.mxu0 %v586
      %618 = vmatprep.subr.bf16.mxu0 0
      %619 = vmatpush2.bf16.msra.mxu0 0
      %620 = vmatprep.subr.bf16.mxu0 0
      %621 = vmatpush2.bf16.msra.mxu0 0
      %622 = vmatprep.subr.bf16.mxu0 0
      %623 = vmatpush2.bf16.msra.mxu0 0
      %624 = vmatprep.subr.bf16.mxu0 0
      %625 = vmatpush2.bf16.msra.mxu0 0
      %626 = vmatprep.subr.bf16.mxu0 0
      %627 = vmatpush2.bf16.msra.mxu0 0
      %628 = vmatprep.subr.bf16.mxu0 0
      %629 = vmatpush2.bf16.msra.mxu0 0
      %630 = vmatprep.subr.bf16.mxu0 0
      %631 = vmatpush2.bf16.msra.mxu0 0
      %632 = vmatprep.subr.bf16.mxu0 0
      %633 = vmatpush2.bf16.msra.mxu0 0
      %634 = vmatprep.mubr.bf16.mxu0 0
      %635 = vmatmul.mubr.bf16.gmra.mxu0 %v537
      %v636 = vpop.f32.mrf.mxu0
      %v637 = vadd.f32 0.0, %v636
      %v638 = vpop.f32.mrf.mxu0
      %v639 = vpop.f32.mrf.mxu0
      %v640 = vpop.f32.mrf.mxu0
      %641 = vdwg.mxu0
      %v642 = vrot.slane %v637, 4
      %v643 = vadd.f32 %v637, %v642
      %v644 = vrot.slane %v643, 2
      %v645 = vadd.f32 %v643, %v644
      %v646 = vrot.slane %v645, 1
      %v647 = vadd.f32 %v645, %v646
      %v648 = vmul.f32 %v647, %v508
      %v649 = vsub.f32 %v637, %v648
      %v650 = vmul.f32 %v649, %v649
      %v651 = vrot.slane %v650, 4
      %v652 = vadd.f32 %v650, %v651
      %v653 = vrot.slane %v652, 2
      %v654 = vadd.f32 %v652, %v653
      %v655 = vrot.slane %v654, 1
      %v656 = vadd.f32 %v654, %v655
      %v657 = vmul.f32 %v656, %v508
      %v658 = vadd.f32 %v657, 1e-05
      %v659 = vrsqrt.pop %v658
      %v660 = vmul.f32 %v649, %v659
      %v661 = vpack.c.bf16 %v660, %v660
      %v662 = vld [vmem:[%s5] sm:$0xf]
      %v663 = vld [vmem:[%s5 + $0x4] sm:$0xf]
      %v664 = vld [vmem:[%s5 + $0x8] sm:$0xf]
      %v665 = vld [vmem:[%s5 + $0xc] sm:$0xf]
      %v666 = vld [vmem:[%s5 + $0x10] sm:$0xf]
      %v667 = vld [vmem:[%s5 + $0x14] sm:$0xf]
      %v668 = vld [vmem:[%s5 + $0x18] sm:$0xf]
      %v669 = vld [vmem:[%s5 + $0x1c] sm:$0xf]
      %v670 = vld [vmem:[%s5 + $0x20] sm:$0xf]
      %v671 = vld [vmem:[%s5 + $0x24] sm:$0xf]
      %v672 = vld [vmem:[%s5 + $0x28] sm:$0xf]
      %v673 = vld [vmem:[%s5 + $0x2c] sm:$0xf]
      %v674 = vld [vmem:[%s5 + $0x30] sm:$0xf]
      %v675 = vld [vmem:[%s5 + $0x34] sm:$0xf]
      %v676 = vld [vmem:[%s5 + $0x38] sm:$0xf]
      %v677 = vld [vmem:[%s5 + $0x3c] sm:$0xf]
      %v694 = vunpack.c.l.b16 %v662
      %v695 = vunpack.c.l.b16 %v663
      %v696 = vunpack.c.l.b16 %v664
      %v697 = vunpack.c.l.b16 %v665
      %v698 = vunpack.c.l.b16 %v666
      %v699 = vunpack.c.l.b16 %v667
      %v700 = vunpack.c.l.b16 %v668
      %v701 = vunpack.c.l.b16 %v669
      %v702 = vunpack.c.l.b16 %v670
      %v703 = vunpack.c.l.b16 %v671
      %v704 = vunpack.c.l.b16 %v672
      %v705 = vunpack.c.l.b16 %v673
      %v706 = vunpack.c.l.b16 %v674
      %v707 = vunpack.c.l.b16 %v675
      %v708 = vunpack.c.l.b16 %v676
      %v709 = vunpack.c.l.b16 %v677
      %v710 = vpack.c.b16 %v695, %v694
      %v711 = vpack.c.b16 %v697, %v696
      %v712 = vpack.c.b16 %v699, %v698
      %v713 = vpack.c.b16 %v701, %v700
      %v714 = vpack.c.b16 %v703, %v702
      %v715 = vpack.c.b16 %v705, %v704
      %v716 = vpack.c.b16 %v707, %v706
      %v717 = vpack.c.b16 %v709, %v708
      %726 = vmatprep.subr.bf16.mxu0 0
      %727 = vmatpush1.bf16.msra.mxu0 %v717
      %728 = vmatprep.subr.bf16.mxu0 0
      %729 = vmatpush1.bf16.msra.mxu0 %v716
      %730 = vmatprep.subr.bf16.mxu0 0
      %731 = vmatpush1.bf16.msra.mxu0 %v715
      %732 = vmatprep.subr.bf16.mxu0 0
      %733 = vmatpush1.bf16.msra.mxu0 %v714
      %734 = vmatprep.subr.bf16.mxu0 0
      %735 = vmatpush1.bf16.msra.mxu0 %v713
      %736 = vmatprep.subr.bf16.mxu0 0
      %737 = vmatpush1.bf16.msra.mxu0 %v712
      %738 = vmatprep.subr.bf16.mxu0 0
      %739 = vmatpush1.bf16.msra.mxu0 %v711
      %740 = vmatprep.subr.bf16.mxu0 0
      %741 = vmatpush1.bf16.msra.mxu0 %v710
      %742 = vmatprep.subr.bf16.mxu0 0
      %743 = vmatpush2.bf16.msra.mxu0 0
      %744 = vmatprep.subr.bf16.mxu0 0
      %745 = vmatpush2.bf16.msra.mxu0 0
      %746 = vmatprep.subr.bf16.mxu0 0
      %747 = vmatpush2.bf16.msra.mxu0 0
      %748 = vmatprep.subr.bf16.mxu0 0
      %749 = vmatpush2.bf16.msra.mxu0 0
      %750 = vmatprep.subr.bf16.mxu0 0
      %751 = vmatpush2.bf16.msra.mxu0 0
      %752 = vmatprep.subr.bf16.mxu0 0
      %753 = vmatpush2.bf16.msra.mxu0 0
      %754 = vmatprep.subr.bf16.mxu0 0
      %755 = vmatpush2.bf16.msra.mxu0 0
      %756 = vmatprep.subr.bf16.mxu0 0
      %757 = vmatpush2.bf16.msra.mxu0 0
      %758 = vmatprep.mubr.bf16.mxu0 0
      %759 = vmatmul.mubr.bf16.gmra.mxu0 %v661
      %v760 = vpop.f32.mrf.mxu0
      %v761 = vadd.f32 0.0, %v760
      %v762 = vpop.f32.mrf.mxu0
      %v763 = vpop.f32.mrf.mxu0
      %v764 = vpop.f32.mrf.mxu0
      %765 = vdwg.mxu0
      %v766 = vld [vmem:[%s6] sm:$0x1]
      %v767 = vld [vmem:[%s7] sm:$0x1]
      %v768 = vrot.slane %v761, 4
      %v769 = vadd.f32 %v761, %v768
      %v770 = vrot.slane %v769, 2
      %v771 = vadd.f32 %v769, %v770
      %v772 = vrot.slane %v771, 1
      %v773 = vadd.f32 %v771, %v772
      %v774 = vmul.f32 %v773, %v508
      %v775 = vsub.f32 %v761, %v774
      %v776 = vmul.f32 %v775, %v775
      %v777 = vrot.slane %v776, 4
      %v778 = vadd.f32 %v776, %v777
      %v779 = vrot.slane %v778, 2
      %v780 = vadd.f32 %v778, %v779
      %v781 = vrot.slane %v780, 1
      %v782 = vadd.f32 %v780, %v781
      %v783 = vmul.f32 %v782, %v508
      %v784 = vadd.f32 %v783, 1e-05
      %v785 = vrsqrt.pop %v784
      %v786 = vmul.f32 %v775, %v785
      %v788 = vlaneseq
      %v789 = vshrl.u32 %v788, 7
      %v790 = vsub.s32 0, %v789
      %v791 = vrot.slane %v766, %v790
      %v793 = vmul.f32 %v786, %v791
      %v795 = vlaneseq
      %v796 = vshrl.u32 %v795, 7
      %v797 = vsub.s32 0, %v796
      %v798 = vrot.slane %v767, %v797
      %v800 = vadd.f32 %v793, %v798
      %v801 = vmax.f32 %v800, 0.0
      %v802 = vpack.c.bf16 %v801, %v801
      %v803 = vld [vmem:[%s8] sm:$0xf]
      %v804 = vld [vmem:[%s8 + $0x4] sm:$0xf]
      %v805 = vld [vmem:[%s8 + $0x8] sm:$0xf]
      %v806 = vld [vmem:[%s8 + $0xc] sm:$0xf]
      %v807 = vld [vmem:[%s8 + $0x10] sm:$0xf]
      %v808 = vld [vmem:[%s8 + $0x14] sm:$0xf]
      %v809 = vld [vmem:[%s8 + $0x18] sm:$0xf]
      %v810 = vld [vmem:[%s8 + $0x1c] sm:$0xf]
      %v811 = vld [vmem:[%s8 + $0x20] sm:$0xf]
      %v812 = vld [vmem:[%s8 + $0x24] sm:$0xf]
      %v813 = vld [vmem:[%s8 + $0x28] sm:$0xf]
      %v814 = vld [vmem:[%s8 + $0x2c] sm:$0xf]
      %v815 = vld [vmem:[%s8 + $0x30] sm:$0xf]
      %v816 = vld [vmem:[%s8 + $0x34] sm:$0xf]
      %v817 = vld [vmem:[%s8 + $0x38] sm:$0xf]
      %v818 = vld [vmem:[%s8 + $0x3c] sm:$0xf]
      %v819 = vld [vmem:[%s9] sm:$0x1]
      %v821 = vlaneseq
      %v822 = vshrl.u32 %v821, 7
      %v823 = vsub.s32 0, %v822
      %v824 = vrot.slane %v819, %v823
      %v842 = vunpack.c.l.b16 %v803
      %v843 = vunpack.c.l.b16 %v804
      %v844 = vunpack.c.l.b16 %v805
      %v845 = vunpack.c.l.b16 %v806
      %v846 = vunpack.c.l.b16 %v807
      %v847 = vunpack.c.l.b16 %v808
      %v848 = vunpack.c.l.b16 %v809
      %v849 = vunpack.c.l.b16 %v810
      %v850 = vunpack.c.l.b16 %v811
      %v851 = vunpack.c.l.b16 %v812
      %v852 = vunpack.c.l.b16 %v813
      %v853 = vunpack.c.l.b16 %v814
      %v854 = vunpack.c.l.b16 %v815
      %v855 = vunpack.c.l.b16 %v816
      %v856 = vunpack.c.l.b16 %v817
      %v857 = vunpack.c.l.b16 %v818
      %v858 = vpack.c.b16 %v843, %v842
      %v859 = vpack.c.b16 %v845, %v844
      %v860 = vpack.c.b16 %v847, %v846
      %v861 = vpack.c.b16 %v849, %v848
      %v862 = vpack.c.b16 %v851, %v850
      %v863 = vpack.c.b16 %v853, %v852
      %v864 = vpack.c.b16 %v855, %v854
      %v865 = vpack.c.b16 %v857, %v856
      %874 = vmatprep.subr.bf16.mxu0 0
      %875 = vmatpush1.bf16.msra.mxu0 %v865
      %876 = vmatprep.subr.bf16.mxu0 0
      %877 = vmatpush1.bf16.msra.mxu0 %v864
      %878 = vmatprep.subr.bf16.mxu0 0
      %879 = vmatpush1.bf16.msra.mxu0 %v863
      %880 = vmatprep.subr.bf16.mxu0 0
      %881 = vmatpush1.bf16.msra.mxu0 %v862
      %882 = vmatprep.subr.bf16.mxu0 0
      %883 = vmatpush1.bf16.msra.mxu0 %v861
      %884 = vmatprep.subr.bf16.mxu0 0
      %885 = vmatpush1.bf16.msra.mxu0 %v860
      %886 = vmatprep.subr.bf16.mxu0 0
      %887 = vmatpush1.bf16.msra.mxu0 %v859
      %888 = vmatprep.subr.bf16.mxu0 0
      %889 = vmatpush1.bf16.msra.mxu0 %v858
      %890 = vmatprep.subr.bf16.mxu0 0
      %891 = vmatpush2.bf16.msra.mxu0 0
      %892 = vmatprep.subr.bf16.mxu0 0
      %893 = vmatpush2.bf16.msra.mxu0 0
      %894 = vmatprep.subr.bf16.mxu0 0
      %895 = vmatpush2.bf16.msra.mxu0 0
      %896 = vmatprep.subr.bf16.mxu0 0
      %897 = vmatpush2.bf16.msra.mxu0 0
      %898 = vmatprep.subr.bf16.mxu0 0
      %899 = vmatpush2.bf16.msra.mxu0 0
      %900 = vmatprep.subr.bf16.mxu0 0
      %901 = vmatpush2.bf16.msra.mxu0 0
      %902 = vmatprep.subr.bf16.mxu0 0
      %903 = vmatpush2.bf16.msra.mxu0 0
      %904 = vmatprep.subr.bf16.mxu0 0
      %905 = vmatpush2.bf16.msra.mxu0 0
      %906 = vmatprep.mubr.bf16.mxu0 0
      %907 = vmatmul.mubr.bf16.gmra.mxu0 %v802
      %v908 = vpop.f32.mrf.mxu0
      %v909 = vadd.f32 %v824, %v908
      %v910 = vpop.f32.mrf.mxu0
      %v911 = vpop.f32.mrf.mxu0
      %v912 = vpop.f32.mrf.mxu0
      %913 = vdwg.mxu0
      %914 = vst [vmem:[%s388] sm:$0xff] %v660
      %915 = vst [vmem:[%s392] sm:$0xff] %v909
      %p916 = scmp.lt.s32.totalorder %s23, 1
      %s917 = scalar_select %p916, %s23, 1
      %s918 = smul.addr %s917, 8
      %s919 = scalar_lea.vmem %s10, %s918
      %p920 = scmp.lt.s32.totalorder %s23, 1
      %s921 = scalar_select %p920, %s23, 1
      %s922 = smul.addr %s921, 8
      %s923 = scalar_lea.vmem %s11, %s922
      // Predicated region
      $region61: #{test_head_forward.2} parent=59 // pred_check
        %p924 = pneg %p256
      $region62: #{test_head_forward.2} parent=59 // pred_check_branch
        %926 = sbr.rel (%p924) target = $region64
      $region63: #{test_head_forward.2} parent=59 // pred_region
        _
      $region64: #{test_head_forward.2} parent=59 // pred_fallthru
        _
      // Predicated region
      $region65: #{test_head_forward.2} parent=59 // pred_check
        %p927 = pneg %p282
      $region66: #{test_head_forward.2} parent=59 // pred_check_branch
        %929 = sbr.rel (%p927) target = $region68
      $region67: #{test_head_forward.2} parent=59 // pred_region
        _
      $region68: #{test_head_forward.2} parent=59 // pred_fallthru
        _
    $region60: #{test_head_forward.2} parent=5 // pred_fallthru
      _
    %p930 = scmp.le.s32.totalorder 2, %s18
    // Predicated region
    $region69: #{test_head_forward.2} parent=5 // pred_check
      %p931 = pneg %p930
    $region70: #{test_head_forward.2} parent=5 // pred_check_branch
      %933 = sbr.rel (%p931) target = $region72
    $region71: #{test_head_forward.2} parent=5 // pred_region
      %s934 = ssub.s32 %s18, 2
      // Predicated region
      $region73: #{test_head_forward.2} parent=71 // pred_check
        %p935 = pneg %p262
      $region74: #{test_head_forward.2} parent=71 // pred_check_branch
        %937 = sbr.rel (%p935) target = $region76
      $region75: #{test_head_forward.2} parent=71 // pred_region
        %p938 = scmp.lt.s32.totalorder %s24, 1
        %s939 = scalar_select %p938, %s24, 1
        %s940 = smul.addr %s939, 8
        %s941 = scalar_lea.vmem %s10, %s940
      $region76: #{test_head_forward.2} parent=71 // pred_fallthru
        _
      // Predicated region
      $region77: #{test_head_forward.2} parent=71 // pred_check
        %p942 = pneg %p288
      $region78: #{test_head_forward.2} parent=71 // pred_check_branch
        %944 = sbr.rel (%p942) target = $region80
      $region79: #{test_head_forward.2} parent=71 // pred_region
        %p945 = scmp.lt.s32.totalorder %s24, 1
        %s946 = scalar_select %p945, %s24, 1
        %s947 = smul.addr %s946, 8
        %s948 = scalar_lea.vmem %s11, %s947
      $region80: #{test_head_forward.2} parent=71 // pred_fallthru
        _
    $region72: #{test_head_forward.2} parent=5 // pred_fallthru
      _
  $region6: #{test_head_forward.2} parent=0 // loop_footer
    %s22 = sadd.s32 1, %s18
  $region7: #{test_head_forward.2} parent=0 // loop_footer_branch
    %17 = sbr.rel target = $region3
  $region8: #{test_head_forward.2} parent=0 // loop_exit
    _

</llo_original>
